<compile_context>
chip_gen: v7x
topology: tpu7x:2x2x1
jax: 0.10.0
libtpu: 0.0.40
codegen_flags: <defaults>
</compile_context>

<pallas_src>
import functools

import jax
import jax.numpy as jnp
from jax import lax
from jax.experimental import pallas as pl
from jax.experimental.pallas import tpu as pltpu

_LANES = 128


def _block_kernel(x_ref, wdw_ref, s1_ref, b1_ref, wpw_ref, s2_ref, b2_ref, o_ref,
                  *, stride, Ho, Wo):
    # x_ref:   (B_t, Hp, Wp, Cp_in)  zero-padded (spatial + channel) input tile
    # wdw_ref: (9, Cp_in)            depthwise 3x3 weights, taps x channel
    # s1/b1:   (1, Cp_in)            folded BN1 scale / shift
    # wpw_ref: (Cp_in, Cp_out)       pointwise weights (zero-padded)
    # s2/b2:   (1, Cp_out)           folded BN2 scale / shift
    # o_ref:   (B_t*Ho*Wo, Cp_out)   lane-dense 2-D output slab
    B = x_ref.shape[0]
    Cp_in = x_ref.shape[-1]

    # Depthwise 3x3 at stride 1 over the rows/cols the strided output needs.
    H1 = (Ho - 1) * stride + 1
    W1 = (Wo - 1) * stride + 1

    def tap(kh, kw):
        # Read each shifted window directly from VMEM (no full-tile materialize).
        return x_ref[:, kh:kh + H1, kw:kw + W1, :].astype(jnp.float32)

    # Initialize accumulator with the first tap (saves a zeros + add).
    acc = tap(0, 0) * wdw_ref[0, :]
    for t in range(1, 9):
        kh, kw = divmod(t, 3)
        acc = acc + tap(kh, kw) * wdw_ref[t, :]

    # Subsample once at the end for stride > 1 (avoids 9 strided slices).
    if stride > 1:
        acc = lax.slice(acc, (0, 0, 0, 0), acc.shape, (1, stride, stride, 1))

    # BN1 (folded) + ReLU, all 128-lane dense.
    h = jnp.maximum(acc * s1_ref[0, :] + b1_ref[0, :], 0.0)      # (B, Ho, Wo, Cp_in)

    # Pointwise 1x1 conv == MXU matmul over channels.
    # This reshape only merges leading (non-lane) dims; it is layout-preserving
    # when Wo % 8 == 0 (true for the shapes exercised here).
    hm = h.reshape(B * Ho * Wo, Cp_in)
    y = jnp.dot(hm, wpw_ref[...], preferred_element_type=jnp.float32)

    # BN2 (folded) + ReLU, then one unmasked lane-dense store.
    y = jnp.maximum(y * s2_ref[0, :] + b2_ref[0, :], 0.0)
    o_ref[...] = y.astype(o_ref.dtype)


def _pad_last(a, target):
    pad = target - a.shape[-1]
    if pad == 0:
        return a
    return jnp.pad(a, [(0, 0)] * (a.ndim - 1) + [(0, pad)])


def mobilenet_block(x_nchw, w_dw, w_pw, bn1, bn2, *, stride=1, eps=1e-5,
                    batch_tile=None):
    """Fused depthwise-separable block.

    x_nchw: (N, Cin, H, W) float32
    w_dw:   (3, 3, Cin)      depthwise weights (== torch weight[c, 0, kh, kw])
    w_pw:   (Cin, Cout)      pointwise weights (== torch weight[o, c, 0, 0].T)
    bn1:    (gamma, beta, running_mean, running_var) each (Cin,)
    bn2:    same, each (Cout,)
    Returns (N, Cout, Ho, Wo).
    """
    g1, be1, m1, v1 = bn1
    g2, be2, m2, v2 = bn2
    s1 = g1 * lax.rsqrt(v1 + eps)
    sh1 = be1 - m1 * s1
    s2 = g2 * lax.rsqrt(v2 + eps)
    sh2 = be2 - m2 * s2

    N, Cin, H, W = x_nchw.shape
    Cout = w_pw.shape[1]
    Ho = (H + 2 - 3) // stride + 1
    Wo = (W + 2 - 3) // stride + 1
    Hp, Wp = H + 2, W + 2

    # Pad channels to lane multiples so every op (and the output store) is
    # 128-lane dense.  Padded channels are exactly zero end-to-end because the
    # padded weights and folded BN scale/shift are zero.
    Cp_in = -(-Cin // _LANES) * _LANES
    Cp_out = -(-Cout // _LANES) * _LANES

    # NCHW -> NHWC, zero-pad spatial (padding=1) and channels, outside the kernel.
    x = jnp.transpose(x_nchw, (0, 2, 3, 1))
    x = jnp.pad(x, ((0, 0), (1, 1), (1, 1), (0, Cp_in - Cin)))

    # Batch-tile: target ~512 matmul rows per grid step, capped so one input
    # block stays well within scoped VMEM (leaving room for double-buffering).
    if batch_tile is None:
        batch_tile = max(1, min(N, (512 + Ho * Wo - 1) // (Ho * Wo)))
        bytes_per_img = Hp * Wp * Cp_in * 4
        batch_tile = max(1, min(batch_tile, (8 << 20) // max(1, bytes_per_img)))
    N_pad = -(-N // batch_tile) * batch_tile
    if N_pad > N:
        x = jnp.pad(x, ((0, N_pad - N), (0, 0), (0, 0), (0, 0)))

    # Pad parameters (zeros for the padded channels).
    wdw_flat = _pad_last(w_dw.reshape(9, Cin), Cp_in)
    s1p = _pad_last(s1.reshape(1, -1), Cp_in)
    sh1p = _pad_last(sh1.reshape(1, -1), Cp_in)
    wpw_p = jnp.pad(w_pw, ((0, Cp_in - Cin), (0, Cp_out - Cout)))
    s2p = _pad_last(s2.reshape(1, -1), Cp_out)
    sh2p = _pad_last(sh2.reshape(1, -1), Cp_out)

    rows_per_step = batch_tile * Ho * Wo
    grid = (N_pad // batch_tile,)

    out2d = pl.pallas_call(
        functools.partial(_block_kernel, stride=stride, Ho=Ho, Wo=Wo),
        out_shape=jax.ShapeDtypeStruct((N_pad * Ho * Wo, Cp_out), x.dtype),
        grid_spec=pltpu.PrefetchScalarGridSpec(
            num_scalar_prefetch=0,
            grid=grid,
            in_specs=[
                pl.BlockSpec((batch_tile, Hp, Wp, Cp_in), lambda n: (n, 0, 0, 0)),
                pl.BlockSpec((9, Cp_in), lambda n: (0, 0)),
                pl.BlockSpec((1, Cp_in), lambda n: (0, 0)),
                pl.BlockSpec((1, Cp_in), lambda n: (0, 0)),
                pl.BlockSpec((Cp_in, Cp_out), lambda n: (0, 0)),
                pl.BlockSpec((1, Cp_out), lambda n: (0, 0)),
                pl.BlockSpec((1, Cp_out), lambda n: (0, 0)),
            ],
            out_specs=pl.BlockSpec((rows_per_step, Cp_out), lambda n: (n, 0)),
        ),
        compiler_params=pltpu.CompilerParams(dimension_semantics=("parallel",)),
    )(
        x, wdw_flat, s1p, sh1p, wpw_p, s2p, sh2p,
    )

    # Un-flatten, drop channel/batch padding, back to NCHW -- all outside the kernel.
    out = out2d.reshape(N_pad, Ho, Wo, Cp_out)[:N, :, :, :Cout]
    return jnp.transpose(out, (0, 3, 1, 2))


def reference_block(x_nchw, w_dw, w_pw, bn1, bn2, *, stride=1, eps=1e-5):
    """Pure-JAX reference with identical semantics, for correctness check."""
    g1, be1, m1, v1 = bn1
    g2, be2, m2, v2 = bn2
    x = jnp.transpose(x_nchw, (0, 2, 3, 1))
    Cin = x.shape[-1]
    dn = lax.conv_dimension_numbers(x.shape, (3, 3, 1, Cin), ("NHWC", "HWIO", "NHWC"))
    y = lax.conv_general_dilated(
        x, w_dw.reshape(3, 3, 1, Cin), (stride, stride), [(1, 1), (1, 1)],
        dimension_numbers=dn, feature_group_count=Cin)
    y = (y - m1) / jnp.sqrt(v1 + eps) * g1 + be1
    y = jnp.maximum(y, 0.0)
    y = jnp.einsum("nhwc,co->nhwo", y, w_pw)
    y = (y - m2) / jnp.sqrt(v2 + eps) * g2 + be2
    y = jnp.maximum(y, 0.0)
    return jnp.transpose(y, (0, 3, 1, 2))


if __name__ == "__main__":
    N, Cin, Cout, H, W = 2, 8, 16, 16, 16
    stride = 1

    key = jax.random.PRNGKey(0)
    kx, kdw, kpw, k1, k2 = jax.random.split(key, 5)
    x = jax.random.normal(kx, (N, Cin, H, W), jnp.float32)

    # Deterministic synthetic parameters (shapes per the torch module's __init__).
    w_dw = 0.2 * jax.random.normal(kdw, (3, 3, Cin), jnp.float32)       # depthwise 3x3
    w_pw = 0.2 * jax.random.normal(kpw, (Cin, Cout), jnp.float32)       # pointwise 1x1
    k1a, k1b, k1c, k1d = jax.random.split(k1, 4)
    bn1 = (
        1.0 + 0.1 * jax.random.normal(k1a, (Cin,), jnp.float32),        # gamma
        0.1 * jax.random.normal(k1b, (Cin,), jnp.float32),              # beta
        0.1 * jax.random.normal(k1c, (Cin,), jnp.float32),              # running_mean
        0.5 + jax.random.uniform(k1d, (Cin,), jnp.float32),             # running_var
    )
    k2a, k2b, k2c, k2d = jax.random.split(k2, 4)
    bn2 = (
        1.0 + 0.1 * jax.random.normal(k2a, (Cout,), jnp.float32),
        0.1 * jax.random.normal(k2b, (Cout,), jnp.float32),
        0.1 * jax.random.normal(k2c, (Cout,), jnp.float32),
        0.5 + jax.random.uniform(k2d, (Cout,), jnp.float32),
    )

    out = mobilenet_block(x, w_dw, w_pw, bn1, bn2, stride=stride)
    out = jax.block_until_ready(out)

    ref = reference_block(x, w_dw, w_pw, bn1, bn2, stride=stride)
    ref = jax.block_until_ready(ref)

    assert out.shape == (N, Cout, H // stride, W // stride), out.shape
    assert jnp.allclose(out, ref, rtol=1e-4, atol=1e-4), float(jnp.max(jnp.abs(out - ref)))

    print("KERNEL_OK")
</pallas_src>

<mosaic_0001>
module attributes {stable_mosaic.version = 11 : i64} {
  func.func @_block_kernel(%arg0: i32, %arg1: memref<2x18x18x128xf32, #tpu.memory_space<vmem>>, %arg2: memref<9x128xf32, #tpu.memory_space<vmem>>, %arg3: memref<1x128xf32, #tpu.memory_space<vmem>>, %arg4: memref<1x128xf32, #tpu.memory_space<vmem>>, %arg5: memref<128x128xf32, #tpu.memory_space<vmem>>, %arg6: memref<1x128xf32, #tpu.memory_space<vmem>>, %arg7: memref<1x128xf32, #tpu.memory_space<vmem>>, %arg8: memref<512x128xf32, #tpu.memory_space<vmem>>) attributes {dimension_semantics = [#tpu.dimension_semantics<parallel>], iteration_bounds = array<i64: 1>, scalar_prefetch = 0 : i64, scratch_operands = 0 : i64, tpu.core_type = #tpu.core_type<tc>, window_params = [{transform_indices = @transform_0, window_bounds = array<i64: 2, 18, 18, 128>}, {pipeline_mode = #tpu.pipeline_mode<synchronous>, transform_indices = @transform_1, window_bounds = array<i64: 9, 128>}, {pipeline_mode = #tpu.pipeline_mode<synchronous>, transform_indices = @transform_2, window_bounds = array<i64: 1, 128>}, {pipeline_mode = #tpu.pipeline_mode<synchronous>, transform_indices = @transform_3, window_bounds = array<i64: 1, 128>}, {pipeline_mode = #tpu.pipeline_mode<synchronous>, transform_indices = @transform_4, window_bounds = array<i64: 128, 128>}, {pipeline_mode = #tpu.pipeline_mode<synchronous>, transform_indices = @transform_5, window_bounds = array<i64: 1, 128>}, {pipeline_mode = #tpu.pipeline_mode<synchronous>, transform_indices = @transform_6, window_bounds = array<i64: 1, 128>}, {transform_indices = @transform_7, window_bounds = array<i64: 512, 128>}]} {
    %c0 = arith.constant 0 : index
    %c0_0 = arith.constant 0 : index
    %c0_1 = arith.constant 0 : index
    %c0_2 = arith.constant 0 : index
    %0 = vector.load %arg1[%c0, %c0_0, %c0_1, %c0_2] : memref<2x18x18x128xf32, #tpu.memory_space<vmem>>, vector<2x16x16x128xf32>
    %c0_3 = arith.constant 0 : index
    %c0_4 = arith.constant 0 : index
    %1 = vector.load %arg2[%c0_3, %c0_4] : memref<9x128xf32, #tpu.memory_space<vmem>>, vector<1x128xf32>
    %2 = vector.shape_cast %1 : vector<1x128xf32> to vector<128xf32>
    %3 = vector.shape_cast %2 : vector<128xf32> to vector<1x1x1x128xf32>
    %4 = vector.broadcast %3 : vector<1x1x1x128xf32> to vector<2x16x16x128xf32>
    %5 = arith.mulf %0, %4 : vector<2x16x16x128xf32>
    %c0_5 = arith.constant 0 : index
    %c0_6 = arith.constant 0 : index
    %c1 = arith.constant 1 : index
    %c0_7 = arith.constant 0 : index
    %6 = vector.load %arg1[%c0_5, %c0_6, %c1, %c0_7] : memref<2x18x18x128xf32, #tpu.memory_space<vmem>>, vector<2x16x16x128xf32>
    %c1_8 = arith.constant 1 : index
    %c0_9 = arith.constant 0 : index
    %7 = vector.load %arg2[%c1_8, %c0_9] : memref<9x128xf32, #tpu.memory_space<vmem>>, vector<1x128xf32>
    %8 = vector.shape_cast %7 : vector<1x128xf32> to vector<128xf32>
    %9 = vector.shape_cast %8 : vector<128xf32> to vector<1x1x1x128xf32>
    %10 = vector.broadcast %9 : vector<1x1x1x128xf32> to vector<2x16x16x128xf32>
    %11 = arith.mulf %6, %10 : vector<2x16x16x128xf32>
    %12 = arith.addf %5, %11 : vector<2x16x16x128xf32>
    %c0_10 = arith.constant 0 : index
    %c0_11 = arith.constant 0 : index
    %c2 = arith.constant 2 : index
    %c0_12 = arith.constant 0 : index
    %13 = vector.load %arg1[%c0_10, %c0_11, %c2, %c0_12] : memref<2x18x18x128xf32, #tpu.memory_space<vmem>>, vector<2x16x16x128xf32>
    %c2_13 = arith.constant 2 : index
    %c0_14 = arith.constant 0 : index
    %14 = vector.load %arg2[%c2_13, %c0_14] : memref<9x128xf32, #tpu.memory_space<vmem>>, vector<1x128xf32>
    %15 = vector.shape_cast %14 : vector<1x128xf32> to vector<128xf32>
    %16 = vector.shape_cast %15 : vector<128xf32> to vector<1x1x1x128xf32>
    %17 = vector.broadcast %16 : vector<1x1x1x128xf32> to vector<2x16x16x128xf32>
    %18 = arith.mulf %13, %17 : vector<2x16x16x128xf32>
    %19 = arith.addf %12, %18 : vector<2x16x16x128xf32>
    %c0_15 = arith.constant 0 : index
    %c1_16 = arith.constant 1 : index
    %c0_17 = arith.constant 0 : index
    %c0_18 = arith.constant 0 : index
    %20 = vector.load %arg1[%c0_15, %c1_16, %c0_17, %c0_18] : memref<2x18x18x128xf32, #tpu.memory_space<vmem>>, vector<2x16x16x128xf32>
    %c3 = arith.constant 3 : index
    %c0_19 = arith.constant 0 : index
    %21 = vector.load %arg2[%c3, %c0_19] : memref<9x128xf32, #tpu.memory_space<vmem>>, vector<1x128xf32>
    %22 = vector.shape_cast %21 : vector<1x128xf32> to vector<128xf32>
    %23 = vector.shape_cast %22 : vector<128xf32> to vector<1x1x1x128xf32>
    %24 = vector.broadcast %23 : vector<1x1x1x128xf32> to vector<2x16x16x128xf32>
    %25 = arith.mulf %20, %24 : vector<2x16x16x128xf32>
    %26 = arith.addf %19, %25 : vector<2x16x16x128xf32>
    %c0_20 = arith.constant 0 : index
    %c1_21 = arith.constant 1 : index
    %c1_22 = arith.constant 1 : index
    %c0_23 = arith.constant 0 : index
    %27 = vector.load %arg1[%c0_20, %c1_21, %c1_22, %c0_23] : memref<2x18x18x128xf32, #tpu.memory_space<vmem>>, vector<2x16x16x128xf32>
    %c4 = arith.constant 4 : index
    %c0_24 = arith.constant 0 : index
    %28 = vector.load %arg2[%c4, %c0_24] : memref<9x128xf32, #tpu.memory_space<vmem>>, vector<1x128xf32>
    %29 = vector.shape_cast %28 : vector<1x128xf32> to vector<128xf32>
    %30 = vector.shape_cast %29 : vector<128xf32> to vector<1x1x1x128xf32>
    %31 = vector.broadcast %30 : vector<1x1x1x128xf32> to vector<2x16x16x128xf32>
    %32 = arith.mulf %27, %31 : vector<2x16x16x128xf32>
    %33 = arith.addf %26, %32 : vector<2x16x16x128xf32>
    %c0_25 = arith.constant 0 : index
    %c1_26 = arith.constant 1 : index
    %c2_27 = arith.constant 2 : index
    %c0_28 = arith.constant 0 : index
    %34 = vector.load %arg1[%c0_25, %c1_26, %c2_27, %c0_28] : memref<2x18x18x128xf32, #tpu.memory_space<vmem>>, vector<2x16x16x128xf32>
    %c5 = arith.constant 5 : index
    %c0_29 = arith.constant 0 : index
    %35 = vector.load %arg2[%c5, %c0_29] : memref<9x128xf32, #tpu.memory_space<vmem>>, vector<1x128xf32>
    %36 = vector.shape_cast %35 : vector<1x128xf32> to vector<128xf32>
    %37 = vector.shape_cast %36 : vector<128xf32> to vector<1x1x1x128xf32>
    %38 = vector.broadcast %37 : vector<1x1x1x128xf32> to vector<2x16x16x128xf32>
    %39 = arith.mulf %34, %38 : vector<2x16x16x128xf32>
    %40 = arith.addf %33, %39 : vector<2x16x16x128xf32>
    %c0_30 = arith.constant 0 : index
    %c2_31 = arith.constant 2 : index
    %c0_32 = arith.constant 0 : index
    %c0_33 = arith.constant 0 : index
    %41 = vector.load %arg1[%c0_30, %c2_31, %c0_32, %c0_33] : memref<2x18x18x128xf32, #tpu.memory_space<vmem>>, vector<2x16x16x128xf32>
    %c6 = arith.constant 6 : index
    %c0_34 = arith.constant 0 : index
    %42 = vector.load %arg2[%c6, %c0_34] : memref<9x128xf32, #tpu.memory_space<vmem>>, vector<1x128xf32>
    %43 = vector.shape_cast %42 : vector<1x128xf32> to vector<128xf32>
    %44 = vector.shape_cast %43 : vector<128xf32> to vector<1x1x1x128xf32>
    %45 = vector.broadcast %44 : vector<1x1x1x128xf32> to vector<2x16x16x128xf32>
    %46 = arith.mulf %41, %45 : vector<2x16x16x128xf32>
    %47 = arith.addf %40, %46 : vector<2x16x16x128xf32>
    %c0_35 = arith.constant 0 : index
    %c2_36 = arith.constant 2 : index
    %c1_37 = arith.constant 1 : index
    %c0_38 = arith.constant 0 : index
    %48 = vector.load %arg1[%c0_35, %c2_36, %c1_37, %c0_38] : memref<2x18x18x128xf32, #tpu.memory_space<vmem>>, vector<2x16x16x128xf32>
    %c7 = arith.constant 7 : index
    %c0_39 = arith.constant 0 : index
    %49 = vector.load %arg2[%c7, %c0_39] : memref<9x128xf32, #tpu.memory_space<vmem>>, vector<1x128xf32>
    %50 = vector.shape_cast %49 : vector<1x128xf32> to vector<128xf32>
    %51 = vector.shape_cast %50 : vector<128xf32> to vector<1x1x1x128xf32>
    %52 = vector.broadcast %51 : vector<1x1x1x128xf32> to vector<2x16x16x128xf32>
    %53 = arith.mulf %48, %52 : vector<2x16x16x128xf32>
    %54 = arith.addf %47, %53 : vector<2x16x16x128xf32>
    %c0_40 = arith.constant 0 : index
    %c2_41 = arith.constant 2 : index
    %c2_42 = arith.constant 2 : index
    %c0_43 = arith.constant 0 : index
    %55 = vector.load %arg1[%c0_40, %c2_41, %c2_42, %c0_43] : memref<2x18x18x128xf32, #tpu.memory_space<vmem>>, vector<2x16x16x128xf32>
    %c8 = arith.constant 8 : index
    %c0_44 = arith.constant 0 : index
    %56 = vector.load %arg2[%c8, %c0_44] : memref<9x128xf32, #tpu.memory_space<vmem>>, vector<1x128xf32>
    %57 = vector.shape_cast %56 : vector<1x128xf32> to vector<128xf32>
    %58 = vector.shape_cast %57 : vector<128xf32> to vector<1x1x1x128xf32>
    %59 = vector.broadcast %58 : vector<1x1x1x128xf32> to vector<2x16x16x128xf32>
    %60 = arith.mulf %55, %59 : vector<2x16x16x128xf32>
    %61 = arith.addf %54, %60 : vector<2x16x16x128xf32>
    %c0_45 = arith.constant 0 : index
    %c0_46 = arith.constant 0 : index
    %62 = vector.load %arg3[%c0_45, %c0_46] : memref<1x128xf32, #tpu.memory_space<vmem>>, vector<1x128xf32>
    %63 = vector.shape_cast %62 : vector<1x128xf32> to vector<128xf32>
    %64 = vector.shape_cast %63 : vector<128xf32> to vector<1x1x1x128xf32>
    %65 = vector.broadcast %64 : vector<1x1x1x128xf32> to vector<2x16x16x128xf32>
    %66 = arith.mulf %61, %65 : vector<2x16x16x128xf32>
    %c0_47 = arith.constant 0 : index
    %c0_48 = arith.constant 0 : index
    %67 = vector.load %arg4[%c0_47, %c0_48] : memref<1x128xf32, #tpu.memory_space<vmem>>, vector<1x128xf32>
    %68 = vector.shape_cast %67 : vector<1x128xf32> to vector<128xf32>
    %69 = vector.shape_cast %68 : vector<128xf32> to vector<1x1x1x128xf32>
    %70 = vector.broadcast %69 : vector<1x1x1x128xf32> to vector<2x16x16x128xf32>
    %71 = arith.addf %66, %70 : vector<2x16x16x128xf32>
    %cst = arith.constant 0.000000e+00 : f32
    %72 = vector.broadcast %cst : f32 to vector<2x16x16x128xf32>
    %73 = arith.maximumf %71, %72 : vector<2x16x16x128xf32>
    %74 = vector.shape_cast %73 : vector<2x16x16x128xf32> to vector<512x128xf32>
    %c0_49 = arith.constant 0 : index
    %c0_50 = arith.constant 0 : index
    %75 = vector.load %arg5[%c0_49, %c0_50] : memref<128x128xf32, #tpu.memory_space<vmem>>, vector<128x128xf32>
    %cst_51 = arith.constant dense<0.000000e+00> : vector<512x128xf32>
    %76 = tpu.matmul %74, %75, %cst_51 {dimension_numbers = #tpu.dot_dimension_numbers<[1], [0], [0], [1], [0, 0, 1, 1], [], []>} : vector<512x128xf32>, vector<128x128xf32>, vector<512x128xf32> -> vector<512x128xf32>
    %c0_52 = arith.constant 0 : index
    %c0_53 = arith.constant 0 : index
    %77 = vector.load %arg6[%c0_52, %c0_53] : memref<1x128xf32, #tpu.memory_space<vmem>>, vector<1x128xf32>
    %78 = vector.shape_cast %77 : vector<1x128xf32> to vector<128xf32>
    %79 = vector.shape_cast %78 : vector<128xf32> to vector<1x128xf32>
    %80 = vector.broadcast %79 : vector<1x128xf32> to vector<512x128xf32>
    %81 = arith.mulf %76, %80 : vector<512x128xf32>
    %c0_54 = arith.constant 0 : index
    %c0_55 = arith.constant 0 : index
    %82 = vector.load %arg7[%c0_54, %c0_55] : memref<1x128xf32, #tpu.memory_space<vmem>>, vector<1x128xf32>
    %83 = vector.shape_cast %82 : vector<1x128xf32> to vector<128xf32>
    %84 = vector.shape_cast %83 : vector<128xf32> to vector<1x128xf32>
    %85 = vector.broadcast %84 : vector<1x128xf32> to vector<512x128xf32>
    %86 = arith.addf %81, %85 : vector<512x128xf32>
    %cst_56 = arith.constant 0.000000e+00 : f32
    %87 = vector.broadcast %cst_56 : f32 to vector<512x128xf32>
    %88 = arith.maximumf %86, %87 : vector<512x128xf32>
    %c0_57 = arith.constant 0 : index
    %c0_58 = arith.constant 0 : index
    %89 = vector.load %arg8[%c0_57, %c0_58] : memref<512x128xf32, #tpu.memory_space<vmem>>, vector<512x128xf32>
    tpu.vector_store %arg8[%c0_57, %c0_58], %88 {strides = array<i32>} : memref<512x128xf32, #tpu.memory_space<vmem>>, vector<512x128xf32>,
    return
  }
  func.func @transform_0(%arg0: i32) -> (i32, i32, i32, i32) {
    %c0_i32 = arith.constant 0 : i32
    %c0_i32_0 = arith.constant 0 : i32
    %c0_i32_1 = arith.constant 0 : i32
    %c0_i32_2 = arith.constant 0 : i32
    return %arg0, %c0_i32, %c0_i32_0, %c0_i32_1 : i32, i32, i32, i32
  }
  func.func @transform_1(%arg0: i32) -> (i32, i32) {
    %c0_i32 = arith.constant 0 : i32
    %c0_i32_0 = arith.constant 0 : i32
    %c0_i32_1 = arith.constant 0 : i32
    return %c0_i32, %c0_i32_0 : i32, i32
  }
  func.func @transform_2(%arg0: i32) -> (i32, i32) {
    %c0_i32 = arith.constant 0 : i32
    %c0_i32_0 = arith.constant 0 : i32
    %c0_i32_1 = arith.constant 0 : i32
    return %c0_i32, %c0_i32_0 : i32, i32
  }
  func.func @transform_3(%arg0: i32) -> (i32, i32) {
    %c0_i32 = arith.constant 0 : i32
    %c0_i32_0 = arith.constant 0 : i32
    %c0_i32_1 = arith.constant 0 : i32
    return %c0_i32, %c0_i32_0 : i32, i32
  }
  func.func @transform_4(%arg0: i32) -> (i32, i32) {
    %c0_i32 = arith.constant 0 : i32
    %c0_i32_0 = arith.constant 0 : i32
    %c0_i32_1 = arith.constant 0 : i32
    return %c0_i32, %c0_i32_0 : i32, i32
  }
  func.func @transform_5(%arg0: i32) -> (i32, i32) {
    %c0_i32 = arith.constant 0 : i32
    %c0_i32_0 = arith.constant 0 : i32
    %c0_i32_1 = arith.constant 0 : i32
    return %c0_i32, %c0_i32_0 : i32, i32
  }
  func.func @transform_6(%arg0: i32) -> (i32, i32) {
    %c0_i32 = arith.constant 0 : i32
    %c0_i32_0 = arith.constant 0 : i32
    %c0_i32_1 = arith.constant 0 : i32
    return %c0_i32, %c0_i32_0 : i32, i32
  }
  func.func @transform_7(%arg0: i32) -> (i32, i32) {
    %c0_i32 = arith.constant 0 : i32
    %c0_i32_0 = arith.constant 0 : i32
    return %arg0, %c0_i32 : i32, i32
  }
}

</mosaic_0001>

<llo_original>
// kernel: tpu_custom_call.1
$region0: #{tpu_custom_call.1}
  #allocation0 [shape = 'u32[]', space=smem, size = 0x4, offset = 0x4, fixed_abs, tag = 'smem constant byte address 0x4 - core index']
  #allocation1 [shape = 'u32[144,128]{1,0:T(1,128)}', space=vmem, size = 0x12000, scoped, tag = 'internal scratch']
  %s0 = inlined_call_operand.vmem [shape: f32[2,18,18,128], index: 0, kind: input, shape index: {}]
  %s1 = inlined_call_operand.vmem [shape: f32[9,128], index: 1, kind: input, shape index: {}]
  %s2 = inlined_call_operand.vmem [shape: f32[1,128], index: 2, kind: input, shape index: {}]
  %s3 = inlined_call_operand.vmem [shape: f32[1,128], index: 3, kind: input, shape index: {}]
  %s4 = inlined_call_operand.vmem [shape: f32[128,128], index: 4, kind: input, shape index: {}]
  %s5 = inlined_call_operand.vmem [shape: f32[1,128], index: 5, kind: input, shape index: {}]
  %s6 = inlined_call_operand.vmem [shape: f32[1,128], index: 6, kind: input, shape index: {}]
  %s7 = inlined_call_operand.hbm [shape: f32[512,128], index: 7, kind: output, shape index: {}]
  %s8 = sld [smem:[#allocation0]]
  $region38: #{tpu_custom_call.1} parent=0
    _
  %s10 = ssub.s32 1, %s8
  %s11 = scalar_select 0, %s10, %s8
  $region1: #{tpu_custom_call.1} parent=0
    #allocation2 [shape = 'u8[262144]{0}', space=vmem, size = 0x40000, scoped, tag = 'output window, operand 0, single buffered']
    #allocation3 [shape = 's32[1]{0}', space=sflag, size = 0x4, scoped, tag = 'scoped memory for tpu_custom_call.1']
    %12 = vsyncpa [#allocation3], 0
    // Predicated region
    $region2: #{tpu_custom_call.1} parent=1 // pred_check
      _
    $region3: #{tpu_custom_call.1} parent=1 // pred_check_branch
      %14 = sbr.rel (0) target = $region5
    $region4: #{tpu_custom_call.1} parent=1 // pred_region
      _
    $region5: #{tpu_custom_call.1} parent=1 // pred_fallthru
      _
    // Predicated region
    $region6: #{tpu_custom_call.1} parent=1 // pred_check
      _
    $region7: #{tpu_custom_call.1} parent=1 // pred_check_branch
      %16 = sbr.rel (0) target = $region9
    $region8: #{tpu_custom_call.1} parent=1 // pred_region
      _
    $region9: #{tpu_custom_call.1} parent=1 // pred_fallthru
      _
    // Predicated region
    $region10: #{tpu_custom_call.1} parent=1 // pred_check
      _
    $region11: #{tpu_custom_call.1} parent=1 // pred_check_branch
      %18 = sbr.rel (0) target = $region13
    $region12: #{tpu_custom_call.1} parent=1 // pred_region
      _
    $region13: #{tpu_custom_call.1} parent=1 // pred_fallthru
      _
    // Predicated region
    $region14: #{tpu_custom_call.1} parent=1 // pred_check
      _
    $region15: #{tpu_custom_call.1} parent=1 // pred_check_branch
      %20 = sbr.rel (0) target = $region17
    $region16: #{tpu_custom_call.1} parent=1 // pred_region
      _
    $region17: #{tpu_custom_call.1} parent=1 // pred_fallthru
      _
    // Predicated region
    $region18: #{tpu_custom_call.1} parent=1 // pred_check
      _
    $region19: #{tpu_custom_call.1} parent=1 // pred_check_branch
      %22 = sbr.rel (0) target = $region21
    $region20: #{tpu_custom_call.1} parent=1 // pred_region
      _
    $region21: #{tpu_custom_call.1} parent=1 // pred_fallthru
      _
    // Predicated region
    $region22: #{tpu_custom_call.1} parent=1 // pred_check
      _
    $region23: #{tpu_custom_call.1} parent=1 // pred_check_branch
      %24 = sbr.rel (0) target = $region25
    $region24: #{tpu_custom_call.1} parent=1 // pred_region
      _
    $region25: #{tpu_custom_call.1} parent=1 // pred_fallthru
      _
    // Predicated region
    $region26: #{tpu_custom_call.1} parent=1 // pred_check
      _
    $region27: #{tpu_custom_call.1} parent=1 // pred_check_branch
      %26 = sbr.rel (0) target = $region29
    $region28: #{tpu_custom_call.1} parent=1 // pred_region
      _
    $region29: #{tpu_custom_call.1} parent=1 // pred_fallthru
      _
    %v27 = vld [vmem:[%s0] sm:$0xff]
    %v28 = vld [vmem:[%s0 + $0x8] sm:$0xff]
    %v29 = vld [vmem:[%s0 + $0x18] sm:$0xff]
    %v30 = vld [vmem:[%s0 + $0x20] sm:$0xff]
    %v31 = vld [vmem:[%s0 + $0x30] sm:$0xff]
    %v32 = vld [vmem:[%s0 + $0x38] sm:$0xff]
    %v33 = vld [vmem:[%s0 + $0x48] sm:$0xff]
    %v34 = vld [vmem:[%s0 + $0x50] sm:$0xff]
    %v35 = vld [vmem:[%s0 + $0x60] sm:$0xff]
    %v36 = vld [vmem:[%s0 + $0x68] sm:$0xff]
    %v37 = vld [vmem:[%s0 + $0x78] sm:$0xff]
    %v38 = vld [vmem:[%s0 + $0x80] sm:$0xff]
    %v39 = vld [vmem:[%s0 + $0x90] sm:$0xff]
    %v40 = vld [vmem:[%s0 + $0x98] sm:$0xff]
    %v41 = vld [vmem:[%s0 + $0xa8] sm:$0xff]
    %v42 = vld [vmem:[%s0 + $0xb0] sm:$0xff]
    %v43 = vld [vmem:[%s0 + $0xc0] sm:$0xff]
    %v44 = vld [vmem:[%s0 + $0xc8] sm:$0xff]
    %v45 = vld [vmem:[%s0 + $0xd8] sm:$0xff]
    %v46 = vld [vmem:[%s0 + $0xe0] sm:$0xff]
    %v47 = vld [vmem:[%s0 + $0xf0] sm:$0xff]
    %v48 = vld [vmem:[%s0 + $0xf8] sm:$0xff]
    %v49 = vld [vmem:[%s0 + $0x108] sm:$0xff]
    %v50 = vld [vmem:[%s0 + $0x110] sm:$0xff]
    %v51 = vld [vmem:[%s0 + $0x120] sm:$0xff]
    %v52 = vld [vmem:[%s0 + $0x128] sm:$0xff]
    %v53 = vld [vmem:[%s0 + $0x138] sm:$0xff]
    %v54 = vld [vmem:[%s0 + $0x140] sm:$0xff]
    %v55 = vld [vmem:[%s0 + $0x150] sm:$0xff]
    %v56 = vld [vmem:[%s0 + $0x158] sm:$0xff]
    %v57 = vld [vmem:[%s0 + $0x168] sm:$0xff]
    %v58 = vld [vmem:[%s0 + $0x170] sm:$0xff]
    %v59 = vld [vmem:[%s0 + $0x1b0] sm:$0xff]
    %v60 = vld [vmem:[%s0 + $0x1b8] sm:$0xff]
    %v61 = vld [vmem:[%s0 + $0x1c8] sm:$0xff]
    %v62 = vld [vmem:[%s0 + $0x1d0] sm:$0xff]
    %v63 = vld [vmem:[%s0 + $0x1e0] sm:$0xff]
    %v64 = vld [vmem:[%s0 + $0x1e8] sm:$0xff]
    %v65 = vld [vmem:[%s0 + $0x1f8] sm:$0xff]
    %v66 = vld [vmem:[%s0 + $0x200] sm:$0xff]
    %v67 = vld [vmem:[%s0 + $0x210] sm:$0xff]
    %v68 = vld [vmem:[%s0 + $0x218] sm:$0xff]
    %v69 = vld [vmem:[%s0 + $0x228] sm:$0xff]
    %v70 = vld [vmem:[%s0 + $0x230] sm:$0xff]
    %v71 = vld [vmem:[%s0 + $0x240] sm:$0xff]
    %v72 = vld [vmem:[%s0 + $0x248] sm:$0xff]
    %v73 = vld [vmem:[%s0 + $0x258] sm:$0xff]
    %v74 = vld [vmem:[%s0 + $0x260] sm:$0xff]
    %v75 = vld [vmem:[%s0 + $0x270] sm:$0xff]
    %v76 = vld [vmem:[%s0 + $0x278] sm:$0xff]
    %v77 = vld [vmem:[%s0 + $0x288] sm:$0xff]
    %v78 = vld [vmem:[%s0 + $0x290] sm:$0xff]
    %v79 = vld [vmem:[%s0 + $0x2a0] sm:$0xff]
    %v80 = vld [vmem:[%s0 + $0x2a8] sm:$0xff]
    %v81 = vld [vmem:[%s0 + $0x2b8] sm:$0xff]
    %v82 = vld [vmem:[%s0 + $0x2c0] sm:$0xff]
    %v83 = vld [vmem:[%s0 + $0x2d0] sm:$0xff]
    %v84 = vld [vmem:[%s0 + $0x2d8] sm:$0xff]
    %v85 = vld [vmem:[%s0 + $0x2e8] sm:$0xff]
    %v86 = vld [vmem:[%s0 + $0x2f0] sm:$0xff]
    %v87 = vld [vmem:[%s0 + $0x300] sm:$0xff]
    %v88 = vld [vmem:[%s0 + $0x308] sm:$0xff]
    %v89 = vld [vmem:[%s0 + $0x318] sm:$0xff]
    %v90 = vld [vmem:[%s0 + $0x320] sm:$0xff]
    %v91 = vld [vmem:[%s1] sm:$0x1]
    %v92 = vlaneseq
    %v93 = vshrl.u32 %v92, 7
    %v94 = vsub.s32 0, %v93
    %v95 = vrot.slane %v91, %v94
    %v96 = vmul.f32 %v27, %v95
    %v97 = vmul.f32 %v28, %v95
    %v98 = vmul.f32 %v29, %v95
    %v99 = vmul.f32 %v30, %v95
    %v100 = vmul.f32 %v31, %v95
    %v101 = vmul.f32 %v32, %v95
    %v102 = vmul.f32 %v33, %v95
    %v103 = vmul.f32 %v34, %v95
    %v104 = vmul.f32 %v35, %v95
    %v105 = vmul.f32 %v36, %v95
    %v106 = vmul.f32 %v37, %v95
    %v107 = vmul.f32 %v38, %v95
    %v108 = vmul.f32 %v39, %v95
    %v109 = vmul.f32 %v40, %v95
    %v110 = vmul.f32 %v41, %v95
    %v111 = vmul.f32 %v42, %v95
    %v112 = vmul.f32 %v43, %v95
    %v113 = vmul.f32 %v44, %v95
    %v114 = vmul.f32 %v45, %v95
    %v115 = vmul.f32 %v46, %v95
    %v116 = vmul.f32 %v47, %v95
    %v117 = vmul.f32 %v48, %v95
    %v118 = vmul.f32 %v49, %v95
    %v119 = vmul.f32 %v50, %v95
    %v120 = vmul.f32 %v51, %v95
    %v121 = vmul.f32 %v52, %v95
    %v122 = vmul.f32 %v53, %v95
    %v123 = vmul.f32 %v54, %v95
    %v124 = vmul.f32 %v55, %v95
    %v125 = vmul.f32 %v56, %v95
    %v126 = vmul.f32 %v57, %v95
    %v127 = vmul.f32 %v58, %v95
    %v128 = vmul.f32 %v59, %v95
    %v129 = vmul.f32 %v60, %v95
    %v130 = vmul.f32 %v61, %v95
    %v131 = vmul.f32 %v62, %v95
    %v132 = vmul.f32 %v63, %v95
    %v133 = vmul.f32 %v64, %v95
    %v134 = vmul.f32 %v65, %v95
    %v135 = vmul.f32 %v66, %v95
    %v136 = vmul.f32 %v67, %v95
    %v137 = vmul.f32 %v68, %v95
    %v138 = vmul.f32 %v69, %v95
    %v139 = vmul.f32 %v70, %v95
    %v140 = vmul.f32 %v71, %v95
    %v141 = vmul.f32 %v72, %v95
    %v142 = vmul.f32 %v73, %v95
    %v143 = vmul.f32 %v74, %v95
    %v144 = vmul.f32 %v75, %v95
    %v145 = vmul.f32 %v76, %v95
    %v146 = vmul.f32 %v77, %v95
    %v147 = vmul.f32 %v78, %v95
    %v148 = vmul.f32 %v79, %v95
    %v149 = vmul.f32 %v80, %v95
    %v150 = vmul.f32 %v81, %v95
    %v151 = vmul.f32 %v82, %v95
    %v152 = vmul.f32 %v83, %v95
    %v153 = vmul.f32 %v84, %v95
    %v154 = vmul.f32 %v85, %v95
    %v155 = vmul.f32 %v86, %v95
    %v156 = vmul.f32 %v87, %v95
    %v157 = vmul.f32 %v88, %v95
    %v158 = vmul.f32 %v89, %v95
    %v159 = vmul.f32 %v90, %v95
    %v160 = vld [vmem:[%s0 + $0x1] sm:$0xff]
    %v161 = vld [vmem:[%s0 + $0x9] sm:$0xff]
    %v162 = vld [vmem:[%s0 + $0x19] sm:$0xff]
    %v163 = vld [vmem:[%s0 + $0x21] sm:$0xff]
    %v164 = vld [vmem:[%s0 + $0x31] sm:$0xff]
    %v165 = vld [vmem:[%s0 + $0x39] sm:$0xff]
    %v166 = vld [vmem:[%s0 + $0x49] sm:$0xff]
    %v167 = vld [vmem:[%s0 + $0x51] sm:$0xff]
    %v168 = vld [vmem:[%s0 + $0x61] sm:$0xff]
    %v169 = vld [vmem:[%s0 + $0x69] sm:$0xff]
    %v170 = vld [vmem:[%s0 + $0x79] sm:$0xff]
    %v171 = vld [vmem:[%s0 + $0x81] sm:$0xff]
    %v172 = vld [vmem:[%s0 + $0x91] sm:$0xff]
    %v173 = vld [vmem:[%s0 + $0x99] sm:$0xff]
    %v174 = vld [vmem:[%s0 + $0xa9] sm:$0xff]
    %v175 = vld [vmem:[%s0 + $0xb1] sm:$0xff]
    %v176 = vld [vmem:[%s0 + $0xc1] sm:$0xff]
    %v177 = vld [vmem:[%s0 + $0xc9] sm:$0xff]
    %v178 = vld [vmem:[%s0 + $0xd9] sm:$0xff]
    %v179 = vld [vmem:[%s0 + $0xe1] sm:$0xff]
    %v180 = vld [vmem:[%s0 + $0xf1] sm:$0xff]
    %v181 = vld [vmem:[%s0 + $0xf9] sm:$0xff]
    %v182 = vld [vmem:[%s0 + $0x109] sm:$0xff]
    %v183 = vld [vmem:[%s0 + $0x111] sm:$0xff]
    %v184 = vld [vmem:[%s0 + $0x121] sm:$0xff]
    %v185 = vld [vmem:[%s0 + $0x129] sm:$0xff]
    %v186 = vld [vmem:[%s0 + $0x139] sm:$0xff]
    %v187 = vld [vmem:[%s0 + $0x141] sm:$0xff]
    %v188 = vld [vmem:[%s0 + $0x151] sm:$0xff]
    %v189 = vld [vmem:[%s0 + $0x159] sm:$0xff]
    %v190 = vld [vmem:[%s0 + $0x169] sm:$0xff]
    %v191 = vld [vmem:[%s0 + $0x171] sm:$0xff]
    %v192 = vld [vmem:[%s0 + $0x1b1] sm:$0xff]
    %v193 = vld [vmem:[%s0 + $0x1b9] sm:$0xff]
    %v194 = vld [vmem:[%s0 + $0x1c9] sm:$0xff]
    %v195 = vld [vmem:[%s0 + $0x1d1] sm:$0xff]
    %v196 = vld [vmem:[%s0 + $0x1e1] sm:$0xff]
    %v197 = vld [vmem:[%s0 + $0x1e9] sm:$0xff]
    %v198 = vld [vmem:[%s0 + $0x1f9] sm:$0xff]
    %v199 = vld [vmem:[%s0 + $0x201] sm:$0xff]
    %v200 = vld [vmem:[%s0 + $0x211] sm:$0xff]
    %v201 = vld [vmem:[%s0 + $0x219] sm:$0xff]
    %v202 = vld [vmem:[%s0 + $0x229] sm:$0xff]
    %v203 = vld [vmem:[%s0 + $0x231] sm:$0xff]
    %v204 = vld [vmem:[%s0 + $0x241] sm:$0xff]
    %v205 = vld [vmem:[%s0 + $0x249] sm:$0xff]
    %v206 = vld [vmem:[%s0 + $0x259] sm:$0xff]
    %v207 = vld [vmem:[%s0 + $0x261] sm:$0xff]
    %v208 = vld [vmem:[%s0 + $0x271] sm:$0xff]
    %v209 = vld [vmem:[%s0 + $0x279] sm:$0xff]
    %v210 = vld [vmem:[%s0 + $0x289] sm:$0xff]
    %v211 = vld [vmem:[%s0 + $0x291] sm:$0xff]
    %v212 = vld [vmem:[%s0 + $0x2a1] sm:$0xff]
    %v213 = vld [vmem:[%s0 + $0x2a9] sm:$0xff]
    %v214 = vld [vmem:[%s0 + $0x2b9] sm:$0xff]
    %v215 = vld [vmem:[%s0 + $0x2c1] sm:$0xff]
    %v216 = vld [vmem:[%s0 + $0x2d1] sm:$0xff]
    %v217 = vld [vmem:[%s0 + $0x2d9] sm:$0xff]
    %v218 = vld [vmem:[%s0 + $0x2e9] sm:$0xff]
    %v219 = vld [vmem:[%s0 + $0x2f1] sm:$0xff]
    %v220 = vld [vmem:[%s0 + $0x301] sm:$0xff]
    %v221 = vld [vmem:[%s0 + $0x309] sm:$0xff]
    %v222 = vld [vmem:[%s0 + $0x319] sm:$0xff]
    %v223 = vld [vmem:[%s0 + $0x321] sm:$0xff]
    %v224 = vld [vmem:[%s1 + $0x1] sm:$0x1]
    %v225 = vlaneseq
    %v226 = vshrl.u32 %v225, 7
    %v227 = vsub.s32 0, %v226
    %v228 = vrot.slane %v224, %v227
    %v229 = vmul.f32 %v160, %v228
    %v230 = vmul.f32 %v161, %v228
    %v231 = vmul.f32 %v162, %v228
    %v232 = vmul.f32 %v163, %v228
    %v233 = vmul.f32 %v164, %v228
    %v234 = vmul.f32 %v165, %v228
    %v235 = vmul.f32 %v166, %v228
    %v236 = vmul.f32 %v167, %v228
    %v237 = vmul.f32 %v168, %v228
    %v238 = vmul.f32 %v169, %v228
    %v239 = vmul.f32 %v170, %v228
    %v240 = vmul.f32 %v171, %v228
    %v241 = vmul.f32 %v172, %v228
    %v242 = vmul.f32 %v173, %v228
    %v243 = vmul.f32 %v174, %v228
    %v244 = vmul.f32 %v175, %v228
    %v245 = vmul.f32 %v176, %v228
    %v246 = vmul.f32 %v177, %v228
    %v247 = vmul.f32 %v178, %v228
    %v248 = vmul.f32 %v179, %v228
    %v249 = vmul.f32 %v180, %v228
    %v250 = vmul.f32 %v181, %v228
    %v251 = vmul.f32 %v182, %v228
    %v252 = vmul.f32 %v183, %v228
    %v253 = vmul.f32 %v184, %v228
    %v254 = vmul.f32 %v185, %v228
    %v255 = vmul.f32 %v186, %v228
    %v256 = vmul.f32 %v187, %v228
    %v257 = vmul.f32 %v188, %v228
    %v258 = vmul.f32 %v189, %v228
    %v259 = vmul.f32 %v190, %v228
    %v260 = vmul.f32 %v191, %v228
    %v261 = vmul.f32 %v192, %v228
    %v262 = vmul.f32 %v193, %v228
    %v263 = vmul.f32 %v194, %v228
    %v264 = vmul.f32 %v195, %v228
    %v265 = vmul.f32 %v196, %v228
    %v266 = vmul.f32 %v197, %v228
    %v267 = vmul.f32 %v198, %v228
    %v268 = vmul.f32 %v199, %v228
    %v269 = vmul.f32 %v200, %v228
    %v270 = vmul.f32 %v201, %v228
    %v271 = vmul.f32 %v202, %v228
    %v272 = vmul.f32 %v203, %v228
    %v273 = vmul.f32 %v204, %v228
    %v274 = vmul.f32 %v205, %v228
    %v275 = vmul.f32 %v206, %v228
    %v276 = vmul.f32 %v207, %v228
    %v277 = vmul.f32 %v208, %v228
    %v278 = vmul.f32 %v209, %v228
    %v279 = vmul.f32 %v210, %v228
    %v280 = vmul.f32 %v211, %v228
    %v281 = vmul.f32 %v212, %v228
    %v282 = vmul.f32 %v213, %v228
    %v283 = vmul.f32 %v214, %v228
    %v284 = vmul.f32 %v215, %v228
    %v285 = vmul.f32 %v216, %v228
    %v286 = vmul.f32 %v217, %v228
    %v287 = vmul.f32 %v218, %v228
    %v288 = vmul.f32 %v219, %v228
    %v289 = vmul.f32 %v220, %v228
    %v290 = vmul.f32 %v221, %v228
    %v291 = vmul.f32 %v222, %v228
    %v292 = vmul.f32 %v223, %v228
    %v293 = vadd.f32 %v96, %v229
    %v294 = vadd.f32 %v97, %v230
    %v295 = vadd.f32 %v98, %v231
    %v296 = vadd.f32 %v99, %v232
    %v297 = vadd.f32 %v100, %v233
    %v298 = vadd.f32 %v101, %v234
    %v299 = vadd.f32 %v102, %v235
    %v300 = vadd.f32 %v103, %v236
    %v301 = vadd.f32 %v104, %v237
    %v302 = vadd.f32 %v105, %v238
    %v303 = vadd.f32 %v106, %v239
    %v304 = vadd.f32 %v107, %v240
    %v305 = vadd.f32 %v108, %v241
    %v306 = vadd.f32 %v109, %v242
    %v307 = vadd.f32 %v110, %v243
    %v308 = vadd.f32 %v111, %v244
    %v309 = vadd.f32 %v112, %v245
    %v310 = vadd.f32 %v113, %v246
    %v311 = vadd.f32 %v114, %v247
    %v312 = vadd.f32 %v115, %v248
    %v313 = vadd.f32 %v116, %v249
    %v314 = vadd.f32 %v117, %v250
    %v315 = vadd.f32 %v118, %v251
    %v316 = vadd.f32 %v119, %v252
    %v317 = vadd.f32 %v120, %v253
    %v318 = vadd.f32 %v121, %v254
    %v319 = vadd.f32 %v122, %v255
    %v320 = vadd.f32 %v123, %v256
    %v321 = vadd.f32 %v124, %v257
    %v322 = vadd.f32 %v125, %v258
    %v323 = vadd.f32 %v126, %v259
    %v324 = vadd.f32 %v127, %v260
    %v325 = vadd.f32 %v128, %v261
    %v326 = vadd.f32 %v129, %v262
    %v327 = vadd.f32 %v130, %v263
    %v328 = vadd.f32 %v131, %v264
    %v329 = vadd.f32 %v132, %v265
    %v330 = vadd.f32 %v133, %v266
    %v331 = vadd.f32 %v134, %v267
    %v332 = vadd.f32 %v135, %v268
    %v333 = vadd.f32 %v136, %v269
    %v334 = vadd.f32 %v137, %v270
    %v335 = vadd.f32 %v138, %v271
    %v336 = vadd.f32 %v139, %v272
    %v337 = vadd.f32 %v140, %v273
    %v338 = vadd.f32 %v141, %v274
    %v339 = vadd.f32 %v142, %v275
    %v340 = vadd.f32 %v143, %v276
    %v341 = vadd.f32 %v144, %v277
    %v342 = vadd.f32 %v145, %v278
    %v343 = vadd.f32 %v146, %v279
    %v344 = vadd.f32 %v147, %v280
    %v345 = vadd.f32 %v148, %v281
    %v346 = vadd.f32 %v149, %v282
    %v347 = vadd.f32 %v150, %v283
    %v348 = vadd.f32 %v151, %v284
    %v349 = vadd.f32 %v152, %v285
    %v350 = vadd.f32 %v153, %v286
    %v351 = vadd.f32 %v154, %v287
    %v352 = vadd.f32 %v155, %v288
    %v353 = vadd.f32 %v156, %v289
    %v354 = vadd.f32 %v157, %v290
    %v355 = vadd.f32 %v158, %v291
    %v356 = vadd.f32 %v159, %v292
    %v357 = vld [vmem:[%s0 + $0x2] sm:$0xff]
    %v358 = vld [vmem:[%s0 + $0xa] sm:$0xff]
    %v359 = vld [vmem:[%s0 + $0x1a] sm:$0xff]
    %v360 = vld [vmem:[%s0 + $0x22] sm:$0xff]
    %v361 = vld [vmem:[%s0 + $0x32] sm:$0xff]
    %v362 = vld [vmem:[%s0 + $0x3a] sm:$0xff]
    %v363 = vld [vmem:[%s0 + $0x4a] sm:$0xff]
    %v364 = vld [vmem:[%s0 + $0x52] sm:$0xff]
    %v365 = vld [vmem:[%s0 + $0x62] sm:$0xff]
    %v366 = vld [vmem:[%s0 + $0x6a] sm:$0xff]
    %v367 = vld [vmem:[%s0 + $0x7a] sm:$0xff]
    %v368 = vld [vmem:[%s0 + $0x82] sm:$0xff]
    %v369 = vld [vmem:[%s0 + $0x92] sm:$0xff]
    %v370 = vld [vmem:[%s0 + $0x9a] sm:$0xff]
    %v371 = vld [vmem:[%s0 + $0xaa] sm:$0xff]
    %v372 = vld [vmem:[%s0 + $0xb2] sm:$0xff]
    %v373 = vld [vmem:[%s0 + $0xc2] sm:$0xff]
    %v374 = vld [vmem:[%s0 + $0xca] sm:$0xff]
    %v375 = vld [vmem:[%s0 + $0xda] sm:$0xff]
    %v376 = vld [vmem:[%s0 + $0xe2] sm:$0xff]
    %v377 = vld [vmem:[%s0 + $0xf2] sm:$0xff]
    %v378 = vld [vmem:[%s0 + $0xfa] sm:$0xff]
    %v379 = vld [vmem:[%s0 + $0x10a] sm:$0xff]
    %v380 = vld [vmem:[%s0 + $0x112] sm:$0xff]
    %v381 = vld [vmem:[%s0 + $0x122] sm:$0xff]
    %v382 = vld [vmem:[%s0 + $0x12a] sm:$0xff]
    %v383 = vld [vmem:[%s0 + $0x13a] sm:$0xff]
    %v384 = vld [vmem:[%s0 + $0x142] sm:$0xff]
    %v385 = vld [vmem:[%s0 + $0x152] sm:$0xff]
    %v386 = vld [vmem:[%s0 + $0x15a] sm:$0xff]
    %v387 = vld [vmem:[%s0 + $0x16a] sm:$0xff]
    %v388 = vld [vmem:[%s0 + $0x172] sm:$0xff]
    %v389 = vld [vmem:[%s0 + $0x1b2] sm:$0xff]
    %v390 = vld [vmem:[%s0 + $0x1ba] sm:$0xff]
    %v391 = vld [vmem:[%s0 + $0x1ca] sm:$0xff]
    %v392 = vld [vmem:[%s0 + $0x1d2] sm:$0xff]
    %v393 = vld [vmem:[%s0 + $0x1e2] sm:$0xff]
    %v394 = vld [vmem:[%s0 + $0x1ea] sm:$0xff]
    %v395 = vld [vmem:[%s0 + $0x1fa] sm:$0xff]
    %v396 = vld [vmem:[%s0 + $0x202] sm:$0xff]
    %v397 = vld [vmem:[%s0 + $0x212] sm:$0xff]
    %v398 = vld [vmem:[%s0 + $0x21a] sm:$0xff]
    %v399 = vld [vmem:[%s0 + $0x22a] sm:$0xff]
    %v400 = vld [vmem:[%s0 + $0x232] sm:$0xff]
    %v401 = vld [vmem:[%s0 + $0x242] sm:$0xff]
    %v402 = vld [vmem:[%s0 + $0x24a] sm:$0xff]
    %v403 = vld [vmem:[%s0 + $0x25a] sm:$0xff]
    %v404 = vld [vmem:[%s0 + $0x262] sm:$0xff]
    %v405 = vld [vmem:[%s0 + $0x272] sm:$0xff]
    %v406 = vld [vmem:[%s0 + $0x27a] sm:$0xff]
    %v407 = vld [vmem:[%s0 + $0x28a] sm:$0xff]
    %v408 = vld [vmem:[%s0 + $0x292] sm:$0xff]
    %v409 = vld [vmem:[%s0 + $0x2a2] sm:$0xff]
    %v410 = vld [vmem:[%s0 + $0x2aa] sm:$0xff]
    %v411 = vld [vmem:[%s0 + $0x2ba] sm:$0xff]
    %v412 = vld [vmem:[%s0 + $0x2c2] sm:$0xff]
    %v413 = vld [vmem:[%s0 + $0x2d2] sm:$0xff]
    %v414 = vld [vmem:[%s0 + $0x2da] sm:$0xff]
    %v415 = vld [vmem:[%s0 + $0x2ea] sm:$0xff]
    %v416 = vld [vmem:[%s0 + $0x2f2] sm:$0xff]
    %v417 = vld [vmem:[%s0 + $0x302] sm:$0xff]
    %v418 = vld [vmem:[%s0 + $0x30a] sm:$0xff]
    %v419 = vld [vmem:[%s0 + $0x31a] sm:$0xff]
    %v420 = vld [vmem:[%s0 + $0x322] sm:$0xff]
    %v421 = vld [vmem:[%s1 + $0x2] sm:$0x1]
    %v422 = vlaneseq
    %v423 = vshrl.u32 %v422, 7
    %v424 = vsub.s32 0, %v423
    %v425 = vrot.slane %v421, %v424
    %v426 = vmul.f32 %v357, %v425
    %v427 = vmul.f32 %v358, %v425
    %v428 = vmul.f32 %v359, %v425
    %v429 = vmul.f32 %v360, %v425
    %v430 = vmul.f32 %v361, %v425
    %v431 = vmul.f32 %v362, %v425
    %v432 = vmul.f32 %v363, %v425
    %v433 = vmul.f32 %v364, %v425
    %v434 = vmul.f32 %v365, %v425
    %v435 = vmul.f32 %v366, %v425
    %v436 = vmul.f32 %v367, %v425
    %v437 = vmul.f32 %v368, %v425
    %v438 = vmul.f32 %v369, %v425
    %v439 = vmul.f32 %v370, %v425
    %v440 = vmul.f32 %v371, %v425
    %v441 = vmul.f32 %v372, %v425
    %v442 = vmul.f32 %v373, %v425
    %v443 = vmul.f32 %v374, %v425
    %v444 = vmul.f32 %v375, %v425
    %v445 = vmul.f32 %v376, %v425
    %v446 = vmul.f32 %v377, %v425
    %v447 = vmul.f32 %v378, %v425
    %v448 = vmul.f32 %v379, %v425
    %v449 = vmul.f32 %v380, %v425
    %v450 = vmul.f32 %v381, %v425
    %v451 = vmul.f32 %v382, %v425
    %v452 = vmul.f32 %v383, %v425
    %v453 = vmul.f32 %v384, %v425
    %v454 = vmul.f32 %v385, %v425
    %v455 = vmul.f32 %v386, %v425
    %v456 = vmul.f32 %v387, %v425
    %v457 = vmul.f32 %v388, %v425
    %v458 = vmul.f32 %v389, %v425
    %v459 = vmul.f32 %v390, %v425
    %v460 = vmul.f32 %v391, %v425
    %v461 = vmul.f32 %v392, %v425
    %v462 = vmul.f32 %v393, %v425
    %v463 = vmul.f32 %v394, %v425
    %v464 = vmul.f32 %v395, %v425
    %v465 = vmul.f32 %v396, %v425
    %v466 = vmul.f32 %v397, %v425
    %v467 = vmul.f32 %v398, %v425
    %v468 = vmul.f32 %v399, %v425
    %v469 = vmul.f32 %v400, %v425
    %v470 = vmul.f32 %v401, %v425
    %v471 = vmul.f32 %v402, %v425
    %v472 = vmul.f32 %v403, %v425
    %v473 = vmul.f32 %v404, %v425
    %v474 = vmul.f32 %v405, %v425
    %v475 = vmul.f32 %v406, %v425
    %v476 = vmul.f32 %v407, %v425
    %v477 = vmul.f32 %v408, %v425
    %v478 = vmul.f32 %v409, %v425
    %v479 = vmul.f32 %v410, %v425
    %v480 = vmul.f32 %v411, %v425
    %v481 = vmul.f32 %v412, %v425
    %v482 = vmul.f32 %v413, %v425
    %v483 = vmul.f32 %v414, %v425
    %v484 = vmul.f32 %v415, %v425
    %v485 = vmul.f32 %v416, %v425
    %v486 = vmul.f32 %v417, %v425
    %v487 = vmul.f32 %v418, %v425
    %v488 = vmul.f32 %v419, %v425
    %v489 = vmul.f32 %v420, %v425
    %v490 = vadd.f32 %v293, %v426
    %v491 = vadd.f32 %v294, %v427
    %v492 = vadd.f32 %v295, %v428
    %v493 = vadd.f32 %v296, %v429
    %v494 = vadd.f32 %v297, %v430
    %v495 = vadd.f32 %v298, %v431
    %v496 = vadd.f32 %v299, %v432
    %v497 = vadd.f32 %v300, %v433
    %v498 = vadd.f32 %v301, %v434
    %v499 = vadd.f32 %v302, %v435
    %v500 = vadd.f32 %v303, %v436
    %v501 = vadd.f32 %v304, %v437
    %v502 = vadd.f32 %v305, %v438
    %v503 = vadd.f32 %v306, %v439
    %v504 = vadd.f32 %v307, %v440
    %v505 = vadd.f32 %v308, %v441
    %v506 = vadd.f32 %v309, %v442
    %v507 = vadd.f32 %v310, %v443
    %v508 = vadd.f32 %v311, %v444
    %v509 = vadd.f32 %v312, %v445
    %v510 = vadd.f32 %v313, %v446
    %v511 = vadd.f32 %v314, %v447
    %v512 = vadd.f32 %v315, %v448
    %v513 = vadd.f32 %v316, %v449
    %v514 = vadd.f32 %v317, %v450
    %v515 = vadd.f32 %v318, %v451
    %v516 = vadd.f32 %v319, %v452
    %v517 = vadd.f32 %v320, %v453
    %v518 = vadd.f32 %v321, %v454
    %v519 = vadd.f32 %v322, %v455
    %v520 = vadd.f32 %v323, %v456
    %v521 = vadd.f32 %v324, %v457
    %v522 = vadd.f32 %v325, %v458
    %v523 = vadd.f32 %v326, %v459
    %v524 = vadd.f32 %v327, %v460
    %v525 = vadd.f32 %v328, %v461
    %v526 = vadd.f32 %v329, %v462
    %v527 = vadd.f32 %v330, %v463
    %v528 = vadd.f32 %v331, %v464
    %v529 = vadd.f32 %v332, %v465
    %v530 = vadd.f32 %v333, %v466
    %v531 = vadd.f32 %v334, %v467
    %v532 = vadd.f32 %v335, %v468
    %v533 = vadd.f32 %v336, %v469
    %v534 = vadd.f32 %v337, %v470
    %v535 = vadd.f32 %v338, %v471
    %v536 = vadd.f32 %v339, %v472
    %v537 = vadd.f32 %v340, %v473
    %v538 = vadd.f32 %v341, %v474
    %v539 = vadd.f32 %v342, %v475
    %v540 = vadd.f32 %v343, %v476
    %v541 = vadd.f32 %v344, %v477
    %v542 = vadd.f32 %v345, %v478
    %v543 = vadd.f32 %v346, %v479
    %v544 = vadd.f32 %v347, %v480
    %v545 = vadd.f32 %v348, %v481
    %v546 = vadd.f32 %v349, %v482
    %v547 = vadd.f32 %v350, %v483
    %v548 = vadd.f32 %v351, %v484
    %v549 = vadd.f32 %v352, %v485
    %v550 = vadd.f32 %v353, %v486
    %v551 = vadd.f32 %v354, %v487
    %v552 = vadd.f32 %v355, %v488
    %v553 = vadd.f32 %v356, %v489
    %s554 = scalar_lea.vmem %s0, 24
    %v555 = vld [vmem:[%s554] sm:$0xff]
    %v556 = vld [vmem:[%s554 + $0x8] sm:$0xff]
    %v557 = vld [vmem:[%s554 + $0x18] sm:$0xff]
    %v558 = vld [vmem:[%s554 + $0x20] sm:$0xff]
    %v559 = vld [vmem:[%s554 + $0x30] sm:$0xff]
    %v560 = vld [vmem:[%s554 + $0x38] sm:$0xff]
    %v561 = vld [vmem:[%s554 + $0x48] sm:$0xff]
    %v562 = vld [vmem:[%s554 + $0x50] sm:$0xff]
    %v563 = vld [vmem:[%s554 + $0x60] sm:$0xff]
    %v564 = vld [vmem:[%s554 + $0x68] sm:$0xff]
    %v565 = vld [vmem:[%s554 + $0x78] sm:$0xff]
    %v566 = vld [vmem:[%s554 + $0x80] sm:$0xff]
    %v567 = vld [vmem:[%s554 + $0x90] sm:$0xff]
    %v568 = vld [vmem:[%s554 + $0x98] sm:$0xff]
    %v569 = vld [vmem:[%s554 + $0xa8] sm:$0xff]
    %v570 = vld [vmem:[%s554 + $0xb0] sm:$0xff]
    %v571 = vld [vmem:[%s554 + $0xc0] sm:$0xff]
    %v572 = vld [vmem:[%s554 + $0xc8] sm:$0xff]
    %v573 = vld [vmem:[%s554 + $0xd8] sm:$0xff]
    %v574 = vld [vmem:[%s554 + $0xe0] sm:$0xff]
    %v575 = vld [vmem:[%s554 + $0xf0] sm:$0xff]
    %v576 = vld [vmem:[%s554 + $0xf8] sm:$0xff]
    %v577 = vld [vmem:[%s554 + $0x108] sm:$0xff]
    %v578 = vld [vmem:[%s554 + $0x110] sm:$0xff]
    %v579 = vld [vmem:[%s554 + $0x120] sm:$0xff]
    %v580 = vld [vmem:[%s554 + $0x128] sm:$0xff]
    %v581 = vld [vmem:[%s554 + $0x138] sm:$0xff]
    %v582 = vld [vmem:[%s554 + $0x140] sm:$0xff]
    %v583 = vld [vmem:[%s554 + $0x150] sm:$0xff]
    %v584 = vld [vmem:[%s554 + $0x158] sm:$0xff]
    %v585 = vld [vmem:[%s554 + $0x168] sm:$0xff]
    %v586 = vld [vmem:[%s554 + $0x170] sm:$0xff]
    %v587 = vld [vmem:[%s554 + $0x1b0] sm:$0xff]
    %v588 = vld [vmem:[%s554 + $0x1b8] sm:$0xff]
    %v589 = vld [vmem:[%s554 + $0x1c8] sm:$0xff]
    %v590 = vld [vmem:[%s554 + $0x1d0] sm:$0xff]
    %v591 = vld [vmem:[%s554 + $0x1e0] sm:$0xff]
    %v592 = vld [vmem:[%s554 + $0x1e8] sm:$0xff]
    %v593 = vld [vmem:[%s554 + $0x1f8] sm:$0xff]
    %v594 = vld [vmem:[%s554 + $0x200] sm:$0xff]
    %v595 = vld [vmem:[%s554 + $0x210] sm:$0xff]
    %v596 = vld [vmem:[%s554 + $0x218] sm:$0xff]
    %v597 = vld [vmem:[%s554 + $0x228] sm:$0xff]
    %v598 = vld [vmem:[%s554 + $0x230] sm:$0xff]
    %v599 = vld [vmem:[%s554 + $0x240] sm:$0xff]
    %v600 = vld [vmem:[%s554 + $0x248] sm:$0xff]
    %v601 = vld [vmem:[%s554 + $0x258] sm:$0xff]
    %v602 = vld [vmem:[%s554 + $0x260] sm:$0xff]
    %v603 = vld [vmem:[%s554 + $0x270] sm:$0xff]
    %v604 = vld [vmem:[%s554 + $0x278] sm:$0xff]
    %v605 = vld [vmem:[%s554 + $0x288] sm:$0xff]
    %v606 = vld [vmem:[%s554 + $0x290] sm:$0xff]
    %v607 = vld [vmem:[%s554 + $0x2a0] sm:$0xff]
    %v608 = vld [vmem:[%s554 + $0x2a8] sm:$0xff]
    %v609 = vld [vmem:[%s554 + $0x2b8] sm:$0xff]
    %v610 = vld [vmem:[%s554 + $0x2c0] sm:$0xff]
    %v611 = vld [vmem:[%s554 + $0x2d0] sm:$0xff]
    %v612 = vld [vmem:[%s554 + $0x2d8] sm:$0xff]
    %v613 = vld [vmem:[%s554 + $0x2e8] sm:$0xff]
    %v614 = vld [vmem:[%s554 + $0x2f0] sm:$0xff]
    %v615 = vld [vmem:[%s554 + $0x300] sm:$0xff]
    %v616 = vld [vmem:[%s554 + $0x308] sm:$0xff]
    %v617 = vld [vmem:[%s554 + $0x318] sm:$0xff]
    %v618 = vld [vmem:[%s554 + $0x320] sm:$0xff]
    %v619 = vld [vmem:[%s1 + $0x3] sm:$0x1]
    %v620 = vlaneseq
    %v621 = vshrl.u32 %v620, 7
    %v622 = vsub.s32 0, %v621
    %v623 = vrot.slane %v619, %v622
    %v624 = vmul.f32 %v555, %v623
    %v625 = vmul.f32 %v556, %v623
    %v626 = vmul.f32 %v557, %v623
    %v627 = vmul.f32 %v558, %v623
    %v628 = vmul.f32 %v559, %v623
    %v629 = vmul.f32 %v560, %v623
    %v630 = vmul.f32 %v561, %v623
    %v631 = vmul.f32 %v562, %v623
    %v632 = vmul.f32 %v563, %v623
    %v633 = vmul.f32 %v564, %v623
    %v634 = vmul.f32 %v565, %v623
    %v635 = vmul.f32 %v566, %v623
    %v636 = vmul.f32 %v567, %v623
    %v637 = vmul.f32 %v568, %v623
    %v638 = vmul.f32 %v569, %v623
    %v639 = vmul.f32 %v570, %v623
    %v640 = vmul.f32 %v571, %v623
    %v641 = vmul.f32 %v572, %v623
    %v642 = vmul.f32 %v573, %v623
    %v643 = vmul.f32 %v574, %v623
    %v644 = vmul.f32 %v575, %v623
    %v645 = vmul.f32 %v576, %v623
    %v646 = vmul.f32 %v577, %v623
    %v647 = vmul.f32 %v578, %v623
    %v648 = vmul.f32 %v579, %v623
    %v649 = vmul.f32 %v580, %v623
    %v650 = vmul.f32 %v581, %v623
    %v651 = vmul.f32 %v582, %v623
    %v652 = vmul.f32 %v583, %v623
    %v653 = vmul.f32 %v584, %v623
    %v654 = vmul.f32 %v585, %v623
    %v655 = vmul.f32 %v586, %v623
    %v656 = vmul.f32 %v587, %v623
    %v657 = vmul.f32 %v588, %v623
    %v658 = vmul.f32 %v589, %v623
    %v659 = vmul.f32 %v590, %v623
    %v660 = vmul.f32 %v591, %v623
    %v661 = vmul.f32 %v592, %v623
    %v662 = vmul.f32 %v593, %v623
    %v663 = vmul.f32 %v594, %v623
    %v664 = vmul.f32 %v595, %v623
    %v665 = vmul.f32 %v596, %v623
    %v666 = vmul.f32 %v597, %v623
    %v667 = vmul.f32 %v598, %v623
    %v668 = vmul.f32 %v599, %v623
    %v669 = vmul.f32 %v600, %v623
    %v670 = vmul.f32 %v601, %v623
    %v671 = vmul.f32 %v602, %v623
    %v672 = vmul.f32 %v603, %v623
    %v673 = vmul.f32 %v604, %v623
    %v674 = vmul.f32 %v605, %v623
    %v675 = vmul.f32 %v606, %v623
    %v676 = vmul.f32 %v607, %v623
    %v677 = vmul.f32 %v608, %v623
    %v678 = vmul.f32 %v609, %v623
    %v679 = vmul.f32 %v610, %v623
    %v680 = vmul.f32 %v611, %v623
    %v681 = vmul.f32 %v612, %v623
    %v682 = vmul.f32 %v613, %v623
    %v683 = vmul.f32 %v614, %v623
    %v684 = vmul.f32 %v615, %v623
    %v685 = vmul.f32 %v616, %v623
    %v686 = vmul.f32 %v617, %v623
    %v687 = vmul.f32 %v618, %v623
    %v688 = vadd.f32 %v490, %v624
    %v689 = vadd.f32 %v491, %v625
    %v690 = vadd.f32 %v492, %v626
    %v691 = vadd.f32 %v493, %v627
    %v692 = vadd.f32 %v494, %v628
    %v693 = vadd.f32 %v495, %v629
    %v694 = vadd.f32 %v496, %v630
    %v695 = vadd.f32 %v497, %v631
    %v696 = vadd.f32 %v498, %v632
    %v697 = vadd.f32 %v499, %v633
    %v698 = vadd.f32 %v500, %v634
    %v699 = vadd.f32 %v501, %v635
    %v700 = vadd.f32 %v502, %v636
    %v701 = vadd.f32 %v503, %v637
    %v702 = vadd.f32 %v504, %v638
    %v703 = vadd.f32 %v505, %v639
    %v704 = vadd.f32 %v506, %v640
    %v705 = vadd.f32 %v507, %v641
    %v706 = vadd.f32 %v508, %v642
    %v707 = vadd.f32 %v509, %v643
    %v708 = vadd.f32 %v510, %v644
    %v709 = vadd.f32 %v511, %v645
    %v710 = vadd.f32 %v512, %v646
    %v711 = vadd.f32 %v513, %v647
    %v712 = vadd.f32 %v514, %v648
    %v713 = vadd.f32 %v515, %v649
    %v714 = vadd.f32 %v516, %v650
    %v715 = vadd.f32 %v517, %v651
    %v716 = vadd.f32 %v518, %v652
    %v717 = vadd.f32 %v519, %v653
    %v718 = vadd.f32 %v520, %v654
    %v719 = vadd.f32 %v521, %v655
    %v720 = vadd.f32 %v522, %v656
    %v721 = vadd.f32 %v523, %v657
    %v722 = vadd.f32 %v524, %v658
    %v723 = vadd.f32 %v525, %v659
    %v724 = vadd.f32 %v526, %v660
    %v725 = vadd.f32 %v527, %v661
    %v726 = vadd.f32 %v528, %v662
    %v727 = vadd.f32 %v529, %v663
    %v728 = vadd.f32 %v530, %v664
    %v729 = vadd.f32 %v531, %v665
    %v730 = vadd.f32 %v532, %v666
    %v731 = vadd.f32 %v533, %v667
    %v732 = vadd.f32 %v534, %v668
    %v733 = vadd.f32 %v535, %v669
    %v734 = vadd.f32 %v536, %v670
    %v735 = vadd.f32 %v537, %v671
    %v736 = vadd.f32 %v538, %v672
    %v737 = vadd.f32 %v539, %v673
    %v738 = vadd.f32 %v540, %v674
    %v739 = vadd.f32 %v541, %v675
    %v740 = vadd.f32 %v542, %v676
    %v741 = vadd.f32 %v543, %v677
    %v742 = vadd.f32 %v544, %v678
    %v743 = vadd.f32 %v545, %v679
    %v744 = vadd.f32 %v546, %v680
    %v745 = vadd.f32 %v547, %v681
    %v746 = vadd.f32 %v548, %v682
    %v747 = vadd.f32 %v549, %v683
    %v748 = vadd.f32 %v550, %v684
    %v749 = vadd.f32 %v551, %v685
    %v750 = vadd.f32 %v552, %v686
    %v751 = vadd.f32 %v553, %v687
    %v752 = vld [vmem:[%s554 + $0x1] sm:$0xff]
    %v753 = vld [vmem:[%s554 + $0x9] sm:$0xff]
    %v754 = vld [vmem:[%s554 + $0x19] sm:$0xff]
    %v755 = vld [vmem:[%s554 + $0x21] sm:$0xff]
    %v756 = vld [vmem:[%s554 + $0x31] sm:$0xff]
    %v757 = vld [vmem:[%s554 + $0x39] sm:$0xff]
    %v758 = vld [vmem:[%s554 + $0x49] sm:$0xff]
    %v759 = vld [vmem:[%s554 + $0x51] sm:$0xff]
    %v760 = vld [vmem:[%s554 + $0x61] sm:$0xff]
    %v761 = vld [vmem:[%s554 + $0x69] sm:$0xff]
    %v762 = vld [vmem:[%s554 + $0x79] sm:$0xff]
    %v763 = vld [vmem:[%s554 + $0x81] sm:$0xff]
    %v764 = vld [vmem:[%s554 + $0x91] sm:$0xff]
    %v765 = vld [vmem:[%s554 + $0x99] sm:$0xff]
    %v766 = vld [vmem:[%s554 + $0xa9] sm:$0xff]
    %v767 = vld [vmem:[%s554 + $0xb1] sm:$0xff]
    %v768 = vld [vmem:[%s554 + $0xc1] sm:$0xff]
    %v769 = vld [vmem:[%s554 + $0xc9] sm:$0xff]
    %v770 = vld [vmem:[%s554 + $0xd9] sm:$0xff]
    %v771 = vld [vmem:[%s554 + $0xe1] sm:$0xff]
    %v772 = vld [vmem:[%s554 + $0xf1] sm:$0xff]
    %v773 = vld [vmem:[%s554 + $0xf9] sm:$0xff]
    %v774 = vld [vmem:[%s554 + $0x109] sm:$0xff]
    %v775 = vld [vmem:[%s554 + $0x111] sm:$0xff]
    %v776 = vld [vmem:[%s554 + $0x121] sm:$0xff]
    %v777 = vld [vmem:[%s554 + $0x129] sm:$0xff]
    %v778 = vld [vmem:[%s554 + $0x139] sm:$0xff]
    %v779 = vld [vmem:[%s554 + $0x141] sm:$0xff]
    %v780 = vld [vmem:[%s554 + $0x151] sm:$0xff]
    %v781 = vld [vmem:[%s554 + $0x159] sm:$0xff]
    %v782 = vld [vmem:[%s554 + $0x169] sm:$0xff]
    %v783 = vld [vmem:[%s554 + $0x171] sm:$0xff]
    %v784 = vld [vmem:[%s554 + $0x1b1] sm:$0xff]
    %v785 = vld [vmem:[%s554 + $0x1b9] sm:$0xff]
    %v786 = vld [vmem:[%s554 + $0x1c9] sm:$0xff]
    %v787 = vld [vmem:[%s554 + $0x1d1] sm:$0xff]
    %v788 = vld [vmem:[%s554 + $0x1e1] sm:$0xff]
    %v789 = vld [vmem:[%s554 + $0x1e9] sm:$0xff]
    %v790 = vld [vmem:[%s554 + $0x1f9] sm:$0xff]
    %v791 = vld [vmem:[%s554 + $0x201] sm:$0xff]
    %v792 = vld [vmem:[%s554 + $0x211] sm:$0xff]
    %v793 = vld [vmem:[%s554 + $0x219] sm:$0xff]
    %v794 = vld [vmem:[%s554 + $0x229] sm:$0xff]
    %v795 = vld [vmem:[%s554 + $0x231] sm:$0xff]
    %v796 = vld [vmem:[%s554 + $0x241] sm:$0xff]
    %v797 = vld [vmem:[%s554 + $0x249] sm:$0xff]
    %v798 = vld [vmem:[%s554 + $0x259] sm:$0xff]
    %v799 = vld [vmem:[%s554 + $0x261] sm:$0xff]
    %v800 = vld [vmem:[%s554 + $0x271] sm:$0xff]
    %v801 = vld [vmem:[%s554 + $0x279] sm:$0xff]
    %v802 = vld [vmem:[%s554 + $0x289] sm:$0xff]
    %v803 = vld [vmem:[%s554 + $0x291] sm:$0xff]
    %v804 = vld [vmem:[%s554 + $0x2a1] sm:$0xff]
    %v805 = vld [vmem:[%s554 + $0x2a9] sm:$0xff]
    %v806 = vld [vmem:[%s554 + $0x2b9] sm:$0xff]
    %v807 = vld [vmem:[%s554 + $0x2c1] sm:$0xff]
    %v808 = vld [vmem:[%s554 + $0x2d1] sm:$0xff]
    %v809 = vld [vmem:[%s554 + $0x2d9] sm:$0xff]
    %v810 = vld [vmem:[%s554 + $0x2e9] sm:$0xff]
    %v811 = vld [vmem:[%s554 + $0x2f1] sm:$0xff]
    %v812 = vld [vmem:[%s554 + $0x301] sm:$0xff]
    %v813 = vld [vmem:[%s554 + $0x309] sm:$0xff]
    %v814 = vld [vmem:[%s554 + $0x319] sm:$0xff]
    %v815 = vld [vmem:[%s554 + $0x321] sm:$0xff]
    %v816 = vld [vmem:[%s1 + $0x4] sm:$0x1]
    %v817 = vlaneseq
    %v818 = vshrl.u32 %v817, 7
    %v819 = vsub.s32 0, %v818
    %v820 = vrot.slane %v816, %v819
    %v821 = vmul.f32 %v752, %v820
    %v822 = vmul.f32 %v753, %v820
    %v823 = vmul.f32 %v754, %v820
    %v824 = vmul.f32 %v755, %v820
    %v825 = vmul.f32 %v756, %v820
    %v826 = vmul.f32 %v757, %v820
    %v827 = vmul.f32 %v758, %v820
    %v828 = vmul.f32 %v759, %v820
    %v829 = vmul.f32 %v760, %v820
    %v830 = vmul.f32 %v761, %v820
    %v831 = vmul.f32 %v762, %v820
    %v832 = vmul.f32 %v763, %v820
    %v833 = vmul.f32 %v764, %v820
    %v834 = vmul.f32 %v765, %v820
    %v835 = vmul.f32 %v766, %v820
    %v836 = vmul.f32 %v767, %v820
    %v837 = vmul.f32 %v768, %v820
    %v838 = vmul.f32 %v769, %v820
    %v839 = vmul.f32 %v770, %v820
    %v840 = vmul.f32 %v771, %v820
    %v841 = vmul.f32 %v772, %v820
    %v842 = vmul.f32 %v773, %v820
    %v843 = vmul.f32 %v774, %v820
    %v844 = vmul.f32 %v775, %v820
    %v845 = vmul.f32 %v776, %v820
    %v846 = vmul.f32 %v777, %v820
    %v847 = vmul.f32 %v778, %v820
    %v848 = vmul.f32 %v779, %v820
    %v849 = vmul.f32 %v780, %v820
    %v850 = vmul.f32 %v781, %v820
    %v851 = vmul.f32 %v782, %v820
    %v852 = vmul.f32 %v783, %v820
    %v853 = vmul.f32 %v784, %v820
    %v854 = vmul.f32 %v785, %v820
    %v855 = vmul.f32 %v786, %v820
    %v856 = vmul.f32 %v787, %v820
    %v857 = vmul.f32 %v788, %v820
    %v858 = vmul.f32 %v789, %v820
    %v859 = vmul.f32 %v790, %v820
    %v860 = vmul.f32 %v791, %v820
    %v861 = vmul.f32 %v792, %v820
    %v862 = vmul.f32 %v793, %v820
    %v863 = vmul.f32 %v794, %v820
    %v864 = vmul.f32 %v795, %v820
    %v865 = vmul.f32 %v796, %v820
    %v866 = vmul.f32 %v797, %v820
    %v867 = vmul.f32 %v798, %v820
    %v868 = vmul.f32 %v799, %v820
    %v869 = vmul.f32 %v800, %v820
    %v870 = vmul.f32 %v801, %v820
    %v871 = vmul.f32 %v802, %v820
    %v872 = vmul.f32 %v803, %v820
    %v873 = vmul.f32 %v804, %v820
    %v874 = vmul.f32 %v805, %v820
    %v875 = vmul.f32 %v806, %v820
    %v876 = vmul.f32 %v807, %v820
    %v877 = vmul.f32 %v808, %v820
    %v878 = vmul.f32 %v809, %v820
    %v879 = vmul.f32 %v810, %v820
    %v880 = vmul.f32 %v811, %v820
    %v881 = vmul.f32 %v812, %v820
    %v882 = vmul.f32 %v813, %v820
    %v883 = vmul.f32 %v814, %v820
    %v884 = vmul.f32 %v815, %v820
    %v885 = vadd.f32 %v688, %v821
    %v886 = vadd.f32 %v689, %v822
    %v887 = vadd.f32 %v690, %v823
    %v888 = vadd.f32 %v691, %v824
    %v889 = vadd.f32 %v692, %v825
    %v890 = vadd.f32 %v693, %v826
    %v891 = vadd.f32 %v694, %v827
    %v892 = vadd.f32 %v695, %v828
    %v893 = vadd.f32 %v696, %v829
    %v894 = vadd.f32 %v697, %v830
    %v895 = vadd.f32 %v698, %v831
    %v896 = vadd.f32 %v699, %v832
    %v897 = vadd.f32 %v700, %v833
    %v898 = vadd.f32 %v701, %v834
    %v899 = vadd.f32 %v702, %v835
    %v900 = vadd.f32 %v703, %v836
    %v901 = vadd.f32 %v704, %v837
    %v902 = vadd.f32 %v705, %v838
    %v903 = vadd.f32 %v706, %v839
    %v904 = vadd.f32 %v707, %v840
    %v905 = vadd.f32 %v708, %v841
    %v906 = vadd.f32 %v709, %v842
    %v907 = vadd.f32 %v710, %v843
    %v908 = vadd.f32 %v711, %v844
    %v909 = vadd.f32 %v712, %v845
    %v910 = vadd.f32 %v713, %v846
    %v911 = vadd.f32 %v714, %v847
    %v912 = vadd.f32 %v715, %v848
    %v913 = vadd.f32 %v716, %v849
    %v914 = vadd.f32 %v717, %v850
    %v915 = vadd.f32 %v718, %v851
    %v916 = vadd.f32 %v719, %v852
    %v917 = vadd.f32 %v720, %v853
    %v918 = vadd.f32 %v721, %v854
    %v919 = vadd.f32 %v722, %v855
    %v920 = vadd.f32 %v723, %v856
    %v921 = vadd.f32 %v724, %v857
    %v922 = vadd.f32 %v725, %v858
    %v923 = vadd.f32 %v726, %v859
    %v924 = vadd.f32 %v727, %v860
    %v925 = vadd.f32 %v728, %v861
    %v926 = vadd.f32 %v729, %v862
    %v927 = vadd.f32 %v730, %v863
    %v928 = vadd.f32 %v731, %v864
    %v929 = vadd.f32 %v732, %v865
    %v930 = vadd.f32 %v733, %v866
    %v931 = vadd.f32 %v734, %v867
    %v932 = vadd.f32 %v735, %v868
    %v933 = vadd.f32 %v736, %v869
    %v934 = vadd.f32 %v737, %v870
    %v935 = vadd.f32 %v738, %v871
    %v936 = vadd.f32 %v739, %v872
    %v937 = vadd.f32 %v740, %v873
    %v938 = vadd.f32 %v741, %v874
    %v939 = vadd.f32 %v742, %v875
    %v940 = vadd.f32 %v743, %v876
    %v941 = vadd.f32 %v744, %v877
    %v942 = vadd.f32 %v745, %v878
    %v943 = vadd.f32 %v746, %v879
    %v944 = vadd.f32 %v747, %v880
    %v945 = vadd.f32 %v748, %v881
    %v946 = vadd.f32 %v749, %v882
    %v947 = vadd.f32 %v750, %v883
    %v948 = vadd.f32 %v751, %v884
    %v949 = vld [vmem:[%s554 + $0x2] sm:$0xff]
    %v950 = vld [vmem:[%s554 + $0xa] sm:$0xff]
    %v951 = vld [vmem:[%s554 + $0x1a] sm:$0xff]
    %v952 = vld [vmem:[%s554 + $0x22] sm:$0xff]
    %v953 = vld [vmem:[%s554 + $0x32] sm:$0xff]
    %v954 = vld [vmem:[%s554 + $0x3a] sm:$0xff]
    %v955 = vld [vmem:[%s554 + $0x4a] sm:$0xff]
    %v956 = vld [vmem:[%s554 + $0x52] sm:$0xff]
    %v957 = vld [vmem:[%s554 + $0x62] sm:$0xff]
    %v958 = vld [vmem:[%s554 + $0x6a] sm:$0xff]
    %v959 = vld [vmem:[%s554 + $0x7a] sm:$0xff]
    %v960 = vld [vmem:[%s554 + $0x82] sm:$0xff]
    %v961 = vld [vmem:[%s554 + $0x92] sm:$0xff]
    %v962 = vld [vmem:[%s554 + $0x9a] sm:$0xff]
    %v963 = vld [vmem:[%s554 + $0xaa] sm:$0xff]
    %v964 = vld [vmem:[%s554 + $0xb2] sm:$0xff]
    %v965 = vld [vmem:[%s554 + $0xc2] sm:$0xff]
    %v966 = vld [vmem:[%s554 + $0xca] sm:$0xff]
    %v967 = vld [vmem:[%s554 + $0xda] sm:$0xff]
    %v968 = vld [vmem:[%s554 + $0xe2] sm:$0xff]
    %v969 = vld [vmem:[%s554 + $0xf2] sm:$0xff]
    %v970 = vld [vmem:[%s554 + $0xfa] sm:$0xff]
    %v971 = vld [vmem:[%s554 + $0x10a] sm:$0xff]
    %v972 = vld [vmem:[%s554 + $0x112] sm:$0xff]
    %v973 = vld [vmem:[%s554 + $0x122] sm:$0xff]
    %v974 = vld [vmem:[%s554 + $0x12a] sm:$0xff]
    %v975 = vld [vmem:[%s554 + $0x13a] sm:$0xff]
    %v976 = vld [vmem:[%s554 + $0x142] sm:$0xff]
    %v977 = vld [vmem:[%s554 + $0x152] sm:$0xff]
    %v978 = vld [vmem:[%s554 + $0x15a] sm:$0xff]
    %v979 = vld [vmem:[%s554 + $0x16a] sm:$0xff]
    %v980 = vld [vmem:[%s554 + $0x172] sm:$0xff]
    %v981 = vld [vmem:[%s554 + $0x1b2] sm:$0xff]
    %v982 = vld [vmem:[%s554 + $0x1ba] sm:$0xff]
    %v983 = vld [vmem:[%s554 + $0x1ca] sm:$0xff]
    %v984 = vld [vmem:[%s554 + $0x1d2] sm:$0xff]
    %v985 = vld [vmem:[%s554 + $0x1e2] sm:$0xff]
    %v986 = vld [vmem:[%s554 + $0x1ea] sm:$0xff]
    %v987 = vld [vmem:[%s554 + $0x1fa] sm:$0xff]
    %v988 = vld [vmem:[%s554 + $0x202] sm:$0xff]
    %v989 = vld [vmem:[%s554 + $0x212] sm:$0xff]
    %v990 = vld [vmem:[%s554 + $0x21a] sm:$0xff]
    %v991 = vld [vmem:[%s554 + $0x22a] sm:$0xff]
    %v992 = vld [vmem:[%s554 + $0x232] sm:$0xff]
    %v993 = vld [vmem:[%s554 + $0x242] sm:$0xff]
    %v994 = vld [vmem:[%s554 + $0x24a] sm:$0xff]
    %v995 = vld [vmem:[%s554 + $0x25a] sm:$0xff]
    %v996 = vld [vmem:[%s554 + $0x262] sm:$0xff]
    %v997 = vld [vmem:[%s554 + $0x272] sm:$0xff]
    %v998 = vld [vmem:[%s554 + $0x27a] sm:$0xff]
    %v999 = vld [vmem:[%s554 + $0x28a] sm:$0xff]
    %v1000 = vld [vmem:[%s554 + $0x292] sm:$0xff]
    %v1001 = vld [vmem:[%s554 + $0x2a2] sm:$0xff]
    %v1002 = vld [vmem:[%s554 + $0x2aa] sm:$0xff]
    %v1003 = vld [vmem:[%s554 + $0x2ba] sm:$0xff]
    %v1004 = vld [vmem:[%s554 + $0x2c2] sm:$0xff]
    %v1005 = vld [vmem:[%s554 + $0x2d2] sm:$0xff]
    %v1006 = vld [vmem:[%s554 + $0x2da] sm:$0xff]
    %v1007 = vld [vmem:[%s554 + $0x2ea] sm:$0xff]
    %v1008 = vld [vmem:[%s554 + $0x2f2] sm:$0xff]
    %v1009 = vld [vmem:[%s554 + $0x302] sm:$0xff]
    %v1010 = vld [vmem:[%s554 + $0x30a] sm:$0xff]
    %v1011 = vld [vmem:[%s554 + $0x31a] sm:$0xff]
    %v1012 = vld [vmem:[%s554 + $0x322] sm:$0xff]
    %v1013 = vld [vmem:[%s1 + $0x5] sm:$0x1]
    %v1014 = vlaneseq
    %v1015 = vshrl.u32 %v1014, 7
    %v1016 = vsub.s32 0, %v1015
    %v1017 = vrot.slane %v1013, %v1016
    %v1018 = vmul.f32 %v949, %v1017
    %v1019 = vmul.f32 %v950, %v1017
    %v1020 = vmul.f32 %v951, %v1017
    %v1021 = vmul.f32 %v952, %v1017
    %v1022 = vmul.f32 %v953, %v1017
    %v1023 = vmul.f32 %v954, %v1017
    %v1024 = vmul.f32 %v955, %v1017
    %v1025 = vmul.f32 %v956, %v1017
    %v1026 = vmul.f32 %v957, %v1017
    %v1027 = vmul.f32 %v958, %v1017
    %v1028 = vmul.f32 %v959, %v1017
    %v1029 = vmul.f32 %v960, %v1017
    %v1030 = vmul.f32 %v961, %v1017
    %v1031 = vmul.f32 %v962, %v1017
    %v1032 = vmul.f32 %v963, %v1017
    %v1033 = vmul.f32 %v964, %v1017
    %v1034 = vmul.f32 %v965, %v1017
    %v1035 = vmul.f32 %v966, %v1017
    %v1036 = vmul.f32 %v967, %v1017
    %v1037 = vmul.f32 %v968, %v1017
    %v1038 = vmul.f32 %v969, %v1017
    %v1039 = vmul.f32 %v970, %v1017
    %v1040 = vmul.f32 %v971, %v1017
    %v1041 = vmul.f32 %v972, %v1017
    %v1042 = vmul.f32 %v973, %v1017
    %v1043 = vmul.f32 %v974, %v1017
    %v1044 = vmul.f32 %v975, %v1017
    %v1045 = vmul.f32 %v976, %v1017
    %v1046 = vmul.f32 %v977, %v1017
    %v1047 = vmul.f32 %v978, %v1017
    %v1048 = vmul.f32 %v979, %v1017
    %v1049 = vmul.f32 %v980, %v1017
    %v1050 = vmul.f32 %v981, %v1017
    %v1051 = vmul.f32 %v982, %v1017
    %v1052 = vmul.f32 %v983, %v1017
    %v1053 = vmul.f32 %v984, %v1017
    %v1054 = vmul.f32 %v985, %v1017
    %v1055 = vmul.f32 %v986, %v1017
    %v1056 = vmul.f32 %v987, %v1017
    %v1057 = vmul.f32 %v988, %v1017
    %v1058 = vmul.f32 %v989, %v1017
    %v1059 = vmul.f32 %v990, %v1017
    %v1060 = vmul.f32 %v991, %v1017
    %v1061 = vmul.f32 %v992, %v1017
    %v1062 = vmul.f32 %v993, %v1017
    %v1063 = vmul.f32 %v994, %v1017
    %v1064 = vmul.f32 %v995, %v1017
    %v1065 = vmul.f32 %v996, %v1017
    %v1066 = vmul.f32 %v997, %v1017
    %v1067 = vmul.f32 %v998, %v1017
    %v1068 = vmul.f32 %v999, %v1017
    %v1069 = vmul.f32 %v1000, %v1017
    %v1070 = vmul.f32 %v1001, %v1017
    %v1071 = vmul.f32 %v1002, %v1017
    %v1072 = vmul.f32 %v1003, %v1017
    %v1073 = vmul.f32 %v1004, %v1017
    %v1074 = vmul.f32 %v1005, %v1017
    %v1075 = vmul.f32 %v1006, %v1017
    %v1076 = vmul.f32 %v1007, %v1017
    %v1077 = vmul.f32 %v1008, %v1017
    %v1078 = vmul.f32 %v1009, %v1017
    %v1079 = vmul.f32 %v1010, %v1017
    %v1080 = vmul.f32 %v1011, %v1017
    %v1081 = vmul.f32 %v1012, %v1017
    %v1082 = vadd.f32 %v885, %v1018
    %v1083 = vadd.f32 %v886, %v1019
    %v1084 = vadd.f32 %v887, %v1020
    %v1085 = vadd.f32 %v888, %v1021
    %v1086 = vadd.f32 %v889, %v1022
    %v1087 = vadd.f32 %v890, %v1023
    %v1088 = vadd.f32 %v891, %v1024
    %v1089 = vadd.f32 %v892, %v1025
    %v1090 = vadd.f32 %v893, %v1026
    %v1091 = vadd.f32 %v894, %v1027
    %v1092 = vadd.f32 %v895, %v1028
    %v1093 = vadd.f32 %v896, %v1029
    %v1094 = vadd.f32 %v897, %v1030
    %v1095 = vadd.f32 %v898, %v1031
    %v1096 = vadd.f32 %v899, %v1032
    %v1097 = vadd.f32 %v900, %v1033
    %v1098 = vadd.f32 %v901, %v1034
    %v1099 = vadd.f32 %v902, %v1035
    %v1100 = vadd.f32 %v903, %v1036
    %v1101 = vadd.f32 %v904, %v1037
    %v1102 = vadd.f32 %v905, %v1038
    %v1103 = vadd.f32 %v906, %v1039
    %v1104 = vadd.f32 %v907, %v1040
    %v1105 = vadd.f32 %v908, %v1041
    %v1106 = vadd.f32 %v909, %v1042
    %v1107 = vadd.f32 %v910, %v1043
    %v1108 = vadd.f32 %v911, %v1044
    %v1109 = vadd.f32 %v912, %v1045
    %v1110 = vadd.f32 %v913, %v1046
    %v1111 = vadd.f32 %v914, %v1047
    %v1112 = vadd.f32 %v915, %v1048
    %v1113 = vadd.f32 %v916, %v1049
    %v1114 = vadd.f32 %v917, %v1050
    %v1115 = vadd.f32 %v918, %v1051
    %v1116 = vadd.f32 %v919, %v1052
    %v1117 = vadd.f32 %v920, %v1053
    %v1118 = vadd.f32 %v921, %v1054
    %v1119 = vadd.f32 %v922, %v1055
    %v1120 = vadd.f32 %v923, %v1056
    %v1121 = vadd.f32 %v924, %v1057
    %v1122 = vadd.f32 %v925, %v1058
    %v1123 = vadd.f32 %v926, %v1059
    %v1124 = vadd.f32 %v927, %v1060
    %v1125 = vadd.f32 %v928, %v1061
    %v1126 = vadd.f32 %v929, %v1062
    %v1127 = vadd.f32 %v930, %v1063
    %v1128 = vadd.f32 %v931, %v1064
    %v1129 = vadd.f32 %v932, %v1065
    %v1130 = vadd.f32 %v933, %v1066
    %v1131 = vadd.f32 %v934, %v1067
    %v1132 = vadd.f32 %v935, %v1068
    %v1133 = vadd.f32 %v936, %v1069
    %v1134 = vadd.f32 %v937, %v1070
    %v1135 = vadd.f32 %v938, %v1071
    %v1136 = vadd.f32 %v939, %v1072
    %v1137 = vadd.f32 %v940, %v1073
    %v1138 = vadd.f32 %v941, %v1074
    %v1139 = vadd.f32 %v942, %v1075
    %v1140 = vadd.f32 %v943, %v1076
    %v1141 = vadd.f32 %v944, %v1077
    %v1142 = vadd.f32 %v945, %v1078
    %v1143 = vadd.f32 %v946, %v1079
    %v1144 = vadd.f32 %v947, %v1080
    %v1145 = vadd.f32 %v948, %v1081
    %s1146 = scalar_lea.vmem %s0, 48
    %v1147 = vld [vmem:[%s1146] sm:$0xff]
    %v1148 = vld [vmem:[%s1146 + $0x8] sm:$0xff]
    %v1149 = vld [vmem:[%s1146 + $0x18] sm:$0xff]
    %v1150 = vld [vmem:[%s1146 + $0x20] sm:$0xff]
    %v1151 = vld [vmem:[%s1146 + $0x30] sm:$0xff]
    %v1152 = vld [vmem:[%s1146 + $0x38] sm:$0xff]
    %v1153 = vld [vmem:[%s1146 + $0x48] sm:$0xff]
    %v1154 = vld [vmem:[%s1146 + $0x50] sm:$0xff]
    %v1155 = vld [vmem:[%s1146 + $0x60] sm:$0xff]
    %v1156 = vld [vmem:[%s1146 + $0x68] sm:$0xff]
    %v1157 = vld [vmem:[%s1146 + $0x78] sm:$0xff]
    %v1158 = vld [vmem:[%s1146 + $0x80] sm:$0xff]
    %v1159 = vld [vmem:[%s1146 + $0x90] sm:$0xff]
    %v1160 = vld [vmem:[%s1146 + $0x98] sm:$0xff]
    %v1161 = vld [vmem:[%s1146 + $0xa8] sm:$0xff]
    %v1162 = vld [vmem:[%s1146 + $0xb0] sm:$0xff]
    %v1163 = vld [vmem:[%s1146 + $0xc0] sm:$0xff]
    %v1164 = vld [vmem:[%s1146 + $0xc8] sm:$0xff]
    %v1165 = vld [vmem:[%s1146 + $0xd8] sm:$0xff]
    %v1166 = vld [vmem:[%s1146 + $0xe0] sm:$0xff]
    %v1167 = vld [vmem:[%s1146 + $0xf0] sm:$0xff]
    %v1168 = vld [vmem:[%s1146 + $0xf8] sm:$0xff]
    %v1169 = vld [vmem:[%s1146 + $0x108] sm:$0xff]
    %v1170 = vld [vmem:[%s1146 + $0x110] sm:$0xff]
    %v1171 = vld [vmem:[%s1146 + $0x120] sm:$0xff]
    %v1172 = vld [vmem:[%s1146 + $0x128] sm:$0xff]
    %v1173 = vld [vmem:[%s1146 + $0x138] sm:$0xff]
    %v1174 = vld [vmem:[%s1146 + $0x140] sm:$0xff]
    %v1175 = vld [vmem:[%s1146 + $0x150] sm:$0xff]
    %v1176 = vld [vmem:[%s1146 + $0x158] sm:$0xff]
    %v1177 = vld [vmem:[%s1146 + $0x168] sm:$0xff]
    %v1178 = vld [vmem:[%s1146 + $0x170] sm:$0xff]
    %v1179 = vld [vmem:[%s1146 + $0x1b0] sm:$0xff]
    %v1180 = vld [vmem:[%s1146 + $0x1b8] sm:$0xff]
    %v1181 = vld [vmem:[%s1146 + $0x1c8] sm:$0xff]
    %v1182 = vld [vmem:[%s1146 + $0x1d0] sm:$0xff]
    %v1183 = vld [vmem:[%s1146 + $0x1e0] sm:$0xff]
    %v1184 = vld [vmem:[%s1146 + $0x1e8] sm:$0xff]
    %v1185 = vld [vmem:[%s1146 + $0x1f8] sm:$0xff]
    %v1186 = vld [vmem:[%s1146 + $0x200] sm:$0xff]
    %v1187 = vld [vmem:[%s1146 + $0x210] sm:$0xff]
    %v1188 = vld [vmem:[%s1146 + $0x218] sm:$0xff]
    %v1189 = vld [vmem:[%s1146 + $0x228] sm:$0xff]
    %v1190 = vld [vmem:[%s1146 + $0x230] sm:$0xff]
    %v1191 = vld [vmem:[%s1146 + $0x240] sm:$0xff]
    %v1192 = vld [vmem:[%s1146 + $0x248] sm:$0xff]
    %v1193 = vld [vmem:[%s1146 + $0x258] sm:$0xff]
    %v1194 = vld [vmem:[%s1146 + $0x260] sm:$0xff]
    %v1195 = vld [vmem:[%s1146 + $0x270] sm:$0xff]
    %v1196 = vld [vmem:[%s1146 + $0x278] sm:$0xff]
    %v1197 = vld [vmem:[%s1146 + $0x288] sm:$0xff]
    %v1198 = vld [vmem:[%s1146 + $0x290] sm:$0xff]
    %v1199 = vld [vmem:[%s1146 + $0x2a0] sm:$0xff]
    %v1200 = vld [vmem:[%s1146 + $0x2a8] sm:$0xff]
    %v1201 = vld [vmem:[%s1146 + $0x2b8] sm:$0xff]
    %v1202 = vld [vmem:[%s1146 + $0x2c0] sm:$0xff]
    %v1203 = vld [vmem:[%s1146 + $0x2d0] sm:$0xff]
    %v1204 = vld [vmem:[%s1146 + $0x2d8] sm:$0xff]
    %v1205 = vld [vmem:[%s1146 + $0x2e8] sm:$0xff]
    %v1206 = vld [vmem:[%s1146 + $0x2f0] sm:$0xff]
    %v1207 = vld [vmem:[%s1146 + $0x300] sm:$0xff]
    %v1208 = vld [vmem:[%s1146 + $0x308] sm:$0xff]
    %v1209 = vld [vmem:[%s1146 + $0x318] sm:$0xff]
    %v1210 = vld [vmem:[%s1146 + $0x320] sm:$0xff]
    %v1211 = vld [vmem:[%s1 + $0x6] sm:$0x1]
    %v1212 = vlaneseq
    %v1213 = vshrl.u32 %v1212, 7
    %v1214 = vsub.s32 0, %v1213
    %v1215 = vrot.slane %v1211, %v1214
    %v1216 = vmul.f32 %v1147, %v1215
    %v1217 = vmul.f32 %v1148, %v1215
    %v1218 = vmul.f32 %v1149, %v1215
    %v1219 = vmul.f32 %v1150, %v1215
    %v1220 = vmul.f32 %v1151, %v1215
    %v1221 = vmul.f32 %v1152, %v1215
    %v1222 = vmul.f32 %v1153, %v1215
    %v1223 = vmul.f32 %v1154, %v1215
    %v1224 = vmul.f32 %v1155, %v1215
    %v1225 = vmul.f32 %v1156, %v1215
    %v1226 = vmul.f32 %v1157, %v1215
    %v1227 = vmul.f32 %v1158, %v1215
    %v1228 = vmul.f32 %v1159, %v1215
    %v1229 = vmul.f32 %v1160, %v1215
    %v1230 = vmul.f32 %v1161, %v1215
    %v1231 = vmul.f32 %v1162, %v1215
    %v1232 = vmul.f32 %v1163, %v1215
    %v1233 = vmul.f32 %v1164, %v1215
    %v1234 = vmul.f32 %v1165, %v1215
    %v1235 = vmul.f32 %v1166, %v1215
    %v1236 = vmul.f32 %v1167, %v1215
    %v1237 = vmul.f32 %v1168, %v1215
    %v1238 = vmul.f32 %v1169, %v1215
    %v1239 = vmul.f32 %v1170, %v1215
    %v1240 = vmul.f32 %v1171, %v1215
    %v1241 = vmul.f32 %v1172, %v1215
    %v1242 = vmul.f32 %v1173, %v1215
    %v1243 = vmul.f32 %v1174, %v1215
    %v1244 = vmul.f32 %v1175, %v1215
    %v1245 = vmul.f32 %v1176, %v1215
    %v1246 = vmul.f32 %v1177, %v1215
    %v1247 = vmul.f32 %v1178, %v1215
    %v1248 = vmul.f32 %v1179, %v1215
    %v1249 = vmul.f32 %v1180, %v1215
    %v1250 = vmul.f32 %v1181, %v1215
    %v1251 = vmul.f32 %v1182, %v1215
    %v1252 = vmul.f32 %v1183, %v1215
    %v1253 = vmul.f32 %v1184, %v1215
    %v1254 = vmul.f32 %v1185, %v1215
    %v1255 = vmul.f32 %v1186, %v1215
    %v1256 = vmul.f32 %v1187, %v1215
    %v1257 = vmul.f32 %v1188, %v1215
    %v1258 = vmul.f32 %v1189, %v1215
    %v1259 = vmul.f32 %v1190, %v1215
    %v1260 = vmul.f32 %v1191, %v1215
    %v1261 = vmul.f32 %v1192, %v1215
    %v1262 = vmul.f32 %v1193, %v1215
    %v1263 = vmul.f32 %v1194, %v1215
    %v1264 = vmul.f32 %v1195, %v1215
    %v1265 = vmul.f32 %v1196, %v1215
    %v1266 = vmul.f32 %v1197, %v1215
    %v1267 = vmul.f32 %v1198, %v1215
    %v1268 = vmul.f32 %v1199, %v1215
    %v1269 = vmul.f32 %v1200, %v1215
    %v1270 = vmul.f32 %v1201, %v1215
    %v1271 = vmul.f32 %v1202, %v1215
    %v1272 = vmul.f32 %v1203, %v1215
    %v1273 = vmul.f32 %v1204, %v1215
    %v1274 = vmul.f32 %v1205, %v1215
    %v1275 = vmul.f32 %v1206, %v1215
    %v1276 = vmul.f32 %v1207, %v1215
    %v1277 = vmul.f32 %v1208, %v1215
    %v1278 = vmul.f32 %v1209, %v1215
    %v1279 = vmul.f32 %v1210, %v1215
    %v1280 = vadd.f32 %v1082, %v1216
    %v1281 = vadd.f32 %v1083, %v1217
    %v1282 = vadd.f32 %v1084, %v1218
    %v1283 = vadd.f32 %v1085, %v1219
    %v1284 = vadd.f32 %v1086, %v1220
    %v1285 = vadd.f32 %v1087, %v1221
    %v1286 = vadd.f32 %v1088, %v1222
    %v1287 = vadd.f32 %v1089, %v1223
    %v1288 = vadd.f32 %v1090, %v1224
    %v1289 = vadd.f32 %v1091, %v1225
    %v1290 = vadd.f32 %v1092, %v1226
    %v1291 = vadd.f32 %v1093, %v1227
    %v1292 = vadd.f32 %v1094, %v1228
    %v1293 = vadd.f32 %v1095, %v1229
    %v1294 = vadd.f32 %v1096, %v1230
    %v1295 = vadd.f32 %v1097, %v1231
    %v1296 = vadd.f32 %v1098, %v1232
    %v1297 = vadd.f32 %v1099, %v1233
    %v1298 = vadd.f32 %v1100, %v1234
    %v1299 = vadd.f32 %v1101, %v1235
    %v1300 = vadd.f32 %v1102, %v1236
    %v1301 = vadd.f32 %v1103, %v1237
    %v1302 = vadd.f32 %v1104, %v1238
    %v1303 = vadd.f32 %v1105, %v1239
    %v1304 = vadd.f32 %v1106, %v1240
    %v1305 = vadd.f32 %v1107, %v1241
    %v1306 = vadd.f32 %v1108, %v1242
    %v1307 = vadd.f32 %v1109, %v1243
    %v1308 = vadd.f32 %v1110, %v1244
    %v1309 = vadd.f32 %v1111, %v1245
    %v1310 = vadd.f32 %v1112, %v1246
    %v1311 = vadd.f32 %v1113, %v1247
    %v1312 = vadd.f32 %v1114, %v1248
    %v1313 = vadd.f32 %v1115, %v1249
    %v1314 = vadd.f32 %v1116, %v1250
    %v1315 = vadd.f32 %v1117, %v1251
    %v1316 = vadd.f32 %v1118, %v1252
    %v1317 = vadd.f32 %v1119, %v1253
    %v1318 = vadd.f32 %v1120, %v1254
    %v1319 = vadd.f32 %v1121, %v1255
    %v1320 = vadd.f32 %v1122, %v1256
    %v1321 = vadd.f32 %v1123, %v1257
    %v1322 = vadd.f32 %v1124, %v1258
    %v1323 = vadd.f32 %v1125, %v1259
    %v1324 = vadd.f32 %v1126, %v1260
    %v1325 = vadd.f32 %v1127, %v1261
    %v1326 = vadd.f32 %v1128, %v1262
    %v1327 = vadd.f32 %v1129, %v1263
    %v1328 = vadd.f32 %v1130, %v1264
    %v1329 = vadd.f32 %v1131, %v1265
    %v1330 = vadd.f32 %v1132, %v1266
    %v1331 = vadd.f32 %v1133, %v1267
    %v1332 = vadd.f32 %v1134, %v1268
    %v1333 = vadd.f32 %v1135, %v1269
    %v1334 = vadd.f32 %v1136, %v1270
    %v1335 = vadd.f32 %v1137, %v1271
    %v1336 = vadd.f32 %v1138, %v1272
    %v1337 = vadd.f32 %v1139, %v1273
    %v1338 = vadd.f32 %v1140, %v1274
    %v1339 = vadd.f32 %v1141, %v1275
    %v1340 = vadd.f32 %v1142, %v1276
    %v1341 = vadd.f32 %v1143, %v1277
    %v1342 = vadd.f32 %v1144, %v1278
    %v1343 = vadd.f32 %v1145, %v1279
    %v1344 = vld [vmem:[%s1146 + $0x1] sm:$0xff]
    %v1345 = vld [vmem:[%s1146 + $0x9] sm:$0xff]
    %v1346 = vld [vmem:[%s1146 + $0x19] sm:$0xff]
    %v1347 = vld [vmem:[%s1146 + $0x21] sm:$0xff]
    %v1348 = vld [vmem:[%s1146 + $0x31] sm:$0xff]
    %v1349 = vld [vmem:[%s1146 + $0x39] sm:$0xff]
    %v1350 = vld [vmem:[%s1146 + $0x49] sm:$0xff]
    %v1351 = vld [vmem:[%s1146 + $0x51] sm:$0xff]
    %v1352 = vld [vmem:[%s1146 + $0x61] sm:$0xff]
    %v1353 = vld [vmem:[%s1146 + $0x69] sm:$0xff]
    %v1354 = vld [vmem:[%s1146 + $0x79] sm:$0xff]
    %v1355 = vld [vmem:[%s1146 + $0x81] sm:$0xff]
    %v1356 = vld [vmem:[%s1146 + $0x91] sm:$0xff]
    %v1357 = vld [vmem:[%s1146 + $0x99] sm:$0xff]
    %v1358 = vld [vmem:[%s1146 + $0xa9] sm:$0xff]
    %v1359 = vld [vmem:[%s1146 + $0xb1] sm:$0xff]
    %v1360 = vld [vmem:[%s1146 + $0xc1] sm:$0xff]
    %v1361 = vld [vmem:[%s1146 + $0xc9] sm:$0xff]
    %v1362 = vld [vmem:[%s1146 + $0xd9] sm:$0xff]
    %v1363 = vld [vmem:[%s1146 + $0xe1] sm:$0xff]
    %v1364 = vld [vmem:[%s1146 + $0xf1] sm:$0xff]
    %v1365 = vld [vmem:[%s1146 + $0xf9] sm:$0xff]
    %v1366 = vld [vmem:[%s1146 + $0x109] sm:$0xff]
    %v1367 = vld [vmem:[%s1146 + $0x111] sm:$0xff]
    %v1368 = vld [vmem:[%s1146 + $0x121] sm:$0xff]
    %v1369 = vld [vmem:[%s1146 + $0x129] sm:$0xff]
    %v1370 = vld [vmem:[%s1146 + $0x139] sm:$0xff]
    %v1371 = vld [vmem:[%s1146 + $0x141] sm:$0xff]
    %v1372 = vld [vmem:[%s1146 + $0x151] sm:$0xff]
    %v1373 = vld [vmem:[%s1146 + $0x159] sm:$0xff]
    %v1374 = vld [vmem:[%s1146 + $0x169] sm:$0xff]
    %v1375 = vld [vmem:[%s1146 + $0x171] sm:$0xff]
    %v1376 = vld [vmem:[%s1146 + $0x1b1] sm:$0xff]
    %v1377 = vld [vmem:[%s1146 + $0x1b9] sm:$0xff]
    %v1378 = vld [vmem:[%s1146 + $0x1c9] sm:$0xff]
    %v1379 = vld [vmem:[%s1146 + $0x1d1] sm:$0xff]
    %v1380 = vld [vmem:[%s1146 + $0x1e1] sm:$0xff]
    %v1381 = vld [vmem:[%s1146 + $0x1e9] sm:$0xff]
    %v1382 = vld [vmem:[%s1146 + $0x1f9] sm:$0xff]
    %v1383 = vld [vmem:[%s1146 + $0x201] sm:$0xff]
    %v1384 = vld [vmem:[%s1146 + $0x211] sm:$0xff]
    %v1385 = vld [vmem:[%s1146 + $0x219] sm:$0xff]
    %v1386 = vld [vmem:[%s1146 + $0x229] sm:$0xff]
    %v1387 = vld [vmem:[%s1146 + $0x231] sm:$0xff]
    %v1388 = vld [vmem:[%s1146 + $0x241] sm:$0xff]
    %v1389 = vld [vmem:[%s1146 + $0x249] sm:$0xff]
    %v1390 = vld [vmem:[%s1146 + $0x259] sm:$0xff]
    %v1391 = vld [vmem:[%s1146 + $0x261] sm:$0xff]
    %v1392 = vld [vmem:[%s1146 + $0x271] sm:$0xff]
    %v1393 = vld [vmem:[%s1146 + $0x279] sm:$0xff]
    %v1394 = vld [vmem:[%s1146 + $0x289] sm:$0xff]
    %v1395 = vld [vmem:[%s1146 + $0x291] sm:$0xff]
    %v1396 = vld [vmem:[%s1146 + $0x2a1] sm:$0xff]
    %v1397 = vld [vmem:[%s1146 + $0x2a9] sm:$0xff]
    %v1398 = vld [vmem:[%s1146 + $0x2b9] sm:$0xff]
    %v1399 = vld [vmem:[%s1146 + $0x2c1] sm:$0xff]
    %v1400 = vld [vmem:[%s1146 + $0x2d1] sm:$0xff]
    %v1401 = vld [vmem:[%s1146 + $0x2d9] sm:$0xff]
    %v1402 = vld [vmem:[%s1146 + $0x2e9] sm:$0xff]
    %v1403 = vld [vmem:[%s1146 + $0x2f1] sm:$0xff]
    %v1404 = vld [vmem:[%s1146 + $0x301] sm:$0xff]
    %v1405 = vld [vmem:[%s1146 + $0x309] sm:$0xff]
    %v1406 = vld [vmem:[%s1146 + $0x319] sm:$0xff]
    %v1407 = vld [vmem:[%s1146 + $0x321] sm:$0xff]
    %v1408 = vld [vmem:[%s1 + $0x7] sm:$0x1]
    %v1409 = vlaneseq
    %v1410 = vshrl.u32 %v1409, 7
    %v1411 = vsub.s32 0, %v1410
    %v1412 = vrot.slane %v1408, %v1411
    %v1413 = vmul.f32 %v1344, %v1412
    %v1414 = vmul.f32 %v1345, %v1412
    %v1415 = vmul.f32 %v1346, %v1412
    %v1416 = vmul.f32 %v1347, %v1412
    %v1417 = vmul.f32 %v1348, %v1412
    %v1418 = vmul.f32 %v1349, %v1412
    %v1419 = vmul.f32 %v1350, %v1412
    %v1420 = vmul.f32 %v1351, %v1412
    %v1421 = vmul.f32 %v1352, %v1412
    %v1422 = vmul.f32 %v1353, %v1412
    %v1423 = vmul.f32 %v1354, %v1412
    %v1424 = vmul.f32 %v1355, %v1412
    %v1425 = vmul.f32 %v1356, %v1412
    %v1426 = vmul.f32 %v1357, %v1412
    %v1427 = vmul.f32 %v1358, %v1412
    %v1428 = vmul.f32 %v1359, %v1412
    %v1429 = vmul.f32 %v1360, %v1412
    %v1430 = vmul.f32 %v1361, %v1412
    %v1431 = vmul.f32 %v1362, %v1412
    %v1432 = vmul.f32 %v1363, %v1412
    %v1433 = vmul.f32 %v1364, %v1412
    %v1434 = vmul.f32 %v1365, %v1412
    %v1435 = vmul.f32 %v1366, %v1412
    %v1436 = vmul.f32 %v1367, %v1412
    %v1437 = vmul.f32 %v1368, %v1412
    %v1438 = vmul.f32 %v1369, %v1412
    %v1439 = vmul.f32 %v1370, %v1412
    %v1440 = vmul.f32 %v1371, %v1412
    %v1441 = vmul.f32 %v1372, %v1412
    %v1442 = vmul.f32 %v1373, %v1412
    %v1443 = vmul.f32 %v1374, %v1412
    %v1444 = vmul.f32 %v1375, %v1412
    %v1445 = vmul.f32 %v1376, %v1412
    %v1446 = vmul.f32 %v1377, %v1412
    %v1447 = vmul.f32 %v1378, %v1412
    %v1448 = vmul.f32 %v1379, %v1412
    %v1449 = vmul.f32 %v1380, %v1412
    %v1450 = vmul.f32 %v1381, %v1412
    %v1451 = vmul.f32 %v1382, %v1412
    %v1452 = vmul.f32 %v1383, %v1412
    %v1453 = vmul.f32 %v1384, %v1412
    %v1454 = vmul.f32 %v1385, %v1412
    %v1455 = vmul.f32 %v1386, %v1412
    %v1456 = vmul.f32 %v1387, %v1412
    %v1457 = vmul.f32 %v1388, %v1412
    %v1458 = vmul.f32 %v1389, %v1412
    %v1459 = vmul.f32 %v1390, %v1412
    %v1460 = vmul.f32 %v1391, %v1412
    %v1461 = vmul.f32 %v1392, %v1412
    %v1462 = vmul.f32 %v1393, %v1412
    %v1463 = vmul.f32 %v1394, %v1412
    %v1464 = vmul.f32 %v1395, %v1412
    %v1465 = vmul.f32 %v1396, %v1412
    %v1466 = vmul.f32 %v1397, %v1412
    %v1467 = vmul.f32 %v1398, %v1412
    %v1468 = vmul.f32 %v1399, %v1412
    %v1469 = vmul.f32 %v1400, %v1412
    %v1470 = vmul.f32 %v1401, %v1412
    %v1471 = vmul.f32 %v1402, %v1412
    %v1472 = vmul.f32 %v1403, %v1412
    %v1473 = vmul.f32 %v1404, %v1412
    %v1474 = vmul.f32 %v1405, %v1412
    %v1475 = vmul.f32 %v1406, %v1412
    %v1476 = vmul.f32 %v1407, %v1412
    %v1477 = vadd.f32 %v1280, %v1413
    %v1478 = vadd.f32 %v1281, %v1414
    %v1479 = vadd.f32 %v1282, %v1415
    %v1480 = vadd.f32 %v1283, %v1416
    %v1481 = vadd.f32 %v1284, %v1417
    %v1482 = vadd.f32 %v1285, %v1418
    %v1483 = vadd.f32 %v1286, %v1419
    %v1484 = vadd.f32 %v1287, %v1420
    %v1485 = vadd.f32 %v1288, %v1421
    %v1486 = vadd.f32 %v1289, %v1422
    %v1487 = vadd.f32 %v1290, %v1423
    %v1488 = vadd.f32 %v1291, %v1424
    %v1489 = vadd.f32 %v1292, %v1425
    %v1490 = vadd.f32 %v1293, %v1426
    %v1491 = vadd.f32 %v1294, %v1427
    %v1492 = vadd.f32 %v1295, %v1428
    %v1493 = vadd.f32 %v1296, %v1429
    %v1494 = vadd.f32 %v1297, %v1430
    %v1495 = vadd.f32 %v1298, %v1431
    %v1496 = vadd.f32 %v1299, %v1432
    %v1497 = vadd.f32 %v1300, %v1433
    %v1498 = vadd.f32 %v1301, %v1434
    %v1499 = vadd.f32 %v1302, %v1435
    %v1500 = vadd.f32 %v1303, %v1436
    %v1501 = vadd.f32 %v1304, %v1437
    %v1502 = vadd.f32 %v1305, %v1438
    %v1503 = vadd.f32 %v1306, %v1439
    %v1504 = vadd.f32 %v1307, %v1440
    %v1505 = vadd.f32 %v1308, %v1441
    %v1506 = vadd.f32 %v1309, %v1442
    %v1507 = vadd.f32 %v1310, %v1443
    %v1508 = vadd.f32 %v1311, %v1444
    %v1509 = vadd.f32 %v1312, %v1445
    %v1510 = vadd.f32 %v1313, %v1446
    %v1511 = vadd.f32 %v1314, %v1447
    %v1512 = vadd.f32 %v1315, %v1448
    %v1513 = vadd.f32 %v1316, %v1449
    %v1514 = vadd.f32 %v1317, %v1450
    %v1515 = vadd.f32 %v1318, %v1451
    %v1516 = vadd.f32 %v1319, %v1452
    %v1517 = vadd.f32 %v1320, %v1453
    %v1518 = vadd.f32 %v1321, %v1454
    %v1519 = vadd.f32 %v1322, %v1455
    %v1520 = vadd.f32 %v1323, %v1456
    %v1521 = vadd.f32 %v1324, %v1457
    %v1522 = vadd.f32 %v1325, %v1458
    %v1523 = vadd.f32 %v1326, %v1459
    %v1524 = vadd.f32 %v1327, %v1460
    %v1525 = vadd.f32 %v1328, %v1461
    %v1526 = vadd.f32 %v1329, %v1462
    %v1527 = vadd.f32 %v1330, %v1463
    %v1528 = vadd.f32 %v1331, %v1464
    %v1529 = vadd.f32 %v1332, %v1465
    %v1530 = vadd.f32 %v1333, %v1466
    %v1531 = vadd.f32 %v1334, %v1467
    %v1532 = vadd.f32 %v1335, %v1468
    %v1533 = vadd.f32 %v1336, %v1469
    %v1534 = vadd.f32 %v1337, %v1470
    %v1535 = vadd.f32 %v1338, %v1471
    %v1536 = vadd.f32 %v1339, %v1472
    %v1537 = vadd.f32 %v1340, %v1473
    %v1538 = vadd.f32 %v1341, %v1474
    %v1539 = vadd.f32 %v1342, %v1475
    %v1540 = vadd.f32 %v1343, %v1476
    %v1541 = vld [vmem:[%s1146 + $0x2] sm:$0xff]
    %v1542 = vld [vmem:[%s1146 + $0xa] sm:$0xff]
    %v1543 = vld [vmem:[%s1146 + $0x1a] sm:$0xff]
    %v1544 = vld [vmem:[%s1146 + $0x22] sm:$0xff]
    %v1545 = vld [vmem:[%s1146 + $0x32] sm:$0xff]
    %v1546 = vld [vmem:[%s1146 + $0x3a] sm:$0xff]
    %v1547 = vld [vmem:[%s1146 + $0x4a] sm:$0xff]
    %v1548 = vld [vmem:[%s1146 + $0x52] sm:$0xff]
    %v1549 = vld [vmem:[%s1146 + $0x62] sm:$0xff]
    %v1550 = vld [vmem:[%s1146 + $0x6a] sm:$0xff]
    %v1551 = vld [vmem:[%s1146 + $0x7a] sm:$0xff]
    %v1552 = vld [vmem:[%s1146 + $0x82] sm:$0xff]
    %v1553 = vld [vmem:[%s1146 + $0x92] sm:$0xff]
    %v1554 = vld [vmem:[%s1146 + $0x9a] sm:$0xff]
    %v1555 = vld [vmem:[%s1146 + $0xaa] sm:$0xff]
    %v1556 = vld [vmem:[%s1146 + $0xb2] sm:$0xff]
    %v1557 = vld [vmem:[%s1146 + $0xc2] sm:$0xff]
    %v1558 = vld [vmem:[%s1146 + $0xca] sm:$0xff]
    %v1559 = vld [vmem:[%s1146 + $0xda] sm:$0xff]
    %v1560 = vld [vmem:[%s1146 + $0xe2] sm:$0xff]
    %v1561 = vld [vmem:[%s1146 + $0xf2] sm:$0xff]
    %v1562 = vld [vmem:[%s1146 + $0xfa] sm:$0xff]
    %v1563 = vld [vmem:[%s1146 + $0x10a] sm:$0xff]
    %v1564 = vld [vmem:[%s1146 + $0x112] sm:$0xff]
    %v1565 = vld [vmem:[%s1146 + $0x122] sm:$0xff]
    %v1566 = vld [vmem:[%s1146 + $0x12a] sm:$0xff]
    %v1567 = vld [vmem:[%s1146 + $0x13a] sm:$0xff]
    %v1568 = vld [vmem:[%s1146 + $0x142] sm:$0xff]
    %v1569 = vld [vmem:[%s1146 + $0x152] sm:$0xff]
    %v1570 = vld [vmem:[%s1146 + $0x15a] sm:$0xff]
    %v1571 = vld [vmem:[%s1146 + $0x16a] sm:$0xff]
    %v1572 = vld [vmem:[%s1146 + $0x172] sm:$0xff]
    %v1573 = vld [vmem:[%s1146 + $0x1b2] sm:$0xff]
    %v1574 = vld [vmem:[%s1146 + $0x1ba] sm:$0xff]
    %v1575 = vld [vmem:[%s1146 + $0x1ca] sm:$0xff]
    %v1576 = vld [vmem:[%s1146 + $0x1d2] sm:$0xff]
    %v1577 = vld [vmem:[%s1146 + $0x1e2] sm:$0xff]
    %v1578 = vld [vmem:[%s1146 + $0x1ea] sm:$0xff]
    %v1579 = vld [vmem:[%s1146 + $0x1fa] sm:$0xff]
    %v1580 = vld [vmem:[%s1146 + $0x202] sm:$0xff]
    %v1581 = vld [vmem:[%s1146 + $0x212] sm:$0xff]
    %v1582 = vld [vmem:[%s1146 + $0x21a] sm:$0xff]
    %v1583 = vld [vmem:[%s1146 + $0x22a] sm:$0xff]
    %v1584 = vld [vmem:[%s1146 + $0x232] sm:$0xff]
    %v1585 = vld [vmem:[%s1146 + $0x242] sm:$0xff]
    %v1586 = vld [vmem:[%s1146 + $0x24a] sm:$0xff]
    %v1587 = vld [vmem:[%s1146 + $0x25a] sm:$0xff]
    %v1588 = vld [vmem:[%s1146 + $0x262] sm:$0xff]
    %v1589 = vld [vmem:[%s1146 + $0x272] sm:$0xff]
    %v1590 = vld [vmem:[%s1146 + $0x27a] sm:$0xff]
    %v1591 = vld [vmem:[%s1146 + $0x28a] sm:$0xff]
    %v1592 = vld [vmem:[%s1146 + $0x292] sm:$0xff]
    %v1593 = vld [vmem:[%s1146 + $0x2a2] sm:$0xff]
    %v1594 = vld [vmem:[%s1146 + $0x2aa] sm:$0xff]
    %v1595 = vld [vmem:[%s1146 + $0x2ba] sm:$0xff]
    %v1596 = vld [vmem:[%s1146 + $0x2c2] sm:$0xff]
    %v1597 = vld [vmem:[%s1146 + $0x2d2] sm:$0xff]
    %v1598 = vld [vmem:[%s1146 + $0x2da] sm:$0xff]
    %v1599 = vld [vmem:[%s1146 + $0x2ea] sm:$0xff]
    %v1600 = vld [vmem:[%s1146 + $0x2f2] sm:$0xff]
    %v1601 = vld [vmem:[%s1146 + $0x302] sm:$0xff]
    %v1602 = vld [vmem:[%s1146 + $0x30a] sm:$0xff]
    %v1603 = vld [vmem:[%s1146 + $0x31a] sm:$0xff]
    %v1604 = vld [vmem:[%s1146 + $0x322] sm:$0xff]
    %v1605 = vld [vmem:[%s1 + $0x8] sm:$0x1]
    %v1606 = vlaneseq
    %v1607 = vshrl.u32 %v1606, 7
    %v1608 = vsub.s32 0, %v1607
    %v1609 = vrot.slane %v1605, %v1608
    %v1610 = vmul.f32 %v1541, %v1609
    %v1611 = vmul.f32 %v1542, %v1609
    %v1612 = vmul.f32 %v1543, %v1609
    %v1613 = vmul.f32 %v1544, %v1609
    %v1614 = vmul.f32 %v1545, %v1609
    %v1615 = vmul.f32 %v1546, %v1609
    %v1616 = vmul.f32 %v1547, %v1609
    %v1617 = vmul.f32 %v1548, %v1609
    %v1618 = vmul.f32 %v1549, %v1609
    %v1619 = vmul.f32 %v1550, %v1609
    %v1620 = vmul.f32 %v1551, %v1609
    %v1621 = vmul.f32 %v1552, %v1609
    %v1622 = vmul.f32 %v1553, %v1609
    %v1623 = vmul.f32 %v1554, %v1609
    %v1624 = vmul.f32 %v1555, %v1609
    %v1625 = vmul.f32 %v1556, %v1609
    %v1626 = vmul.f32 %v1557, %v1609
    %v1627 = vmul.f32 %v1558, %v1609
    %v1628 = vmul.f32 %v1559, %v1609
    %v1629 = vmul.f32 %v1560, %v1609
    %v1630 = vmul.f32 %v1561, %v1609
    %v1631 = vmul.f32 %v1562, %v1609
    %v1632 = vmul.f32 %v1563, %v1609
    %v1633 = vmul.f32 %v1564, %v1609
    %v1634 = vmul.f32 %v1565, %v1609
    %v1635 = vmul.f32 %v1566, %v1609
    %v1636 = vmul.f32 %v1567, %v1609
    %v1637 = vmul.f32 %v1568, %v1609
    %v1638 = vmul.f32 %v1569, %v1609
    %v1639 = vmul.f32 %v1570, %v1609
    %v1640 = vmul.f32 %v1571, %v1609
    %v1641 = vmul.f32 %v1572, %v1609
    %v1642 = vmul.f32 %v1573, %v1609
    %v1643 = vmul.f32 %v1574, %v1609
    %v1644 = vmul.f32 %v1575, %v1609
    %v1645 = vmul.f32 %v1576, %v1609
    %v1646 = vmul.f32 %v1577, %v1609
    %v1647 = vmul.f32 %v1578, %v1609
    %v1648 = vmul.f32 %v1579, %v1609
    %v1649 = vmul.f32 %v1580, %v1609
    %v1650 = vmul.f32 %v1581, %v1609
    %v1651 = vmul.f32 %v1582, %v1609
    %v1652 = vmul.f32 %v1583, %v1609
    %v1653 = vmul.f32 %v1584, %v1609
    %v1654 = vmul.f32 %v1585, %v1609
    %v1655 = vmul.f32 %v1586, %v1609
    %v1656 = vmul.f32 %v1587, %v1609
    %v1657 = vmul.f32 %v1588, %v1609
    %v1658 = vmul.f32 %v1589, %v1609
    %v1659 = vmul.f32 %v1590, %v1609
    %v1660 = vmul.f32 %v1591, %v1609
    %v1661 = vmul.f32 %v1592, %v1609
    %v1662 = vmul.f32 %v1593, %v1609
    %v1663 = vmul.f32 %v1594, %v1609
    %v1664 = vmul.f32 %v1595, %v1609
    %v1665 = vmul.f32 %v1596, %v1609
    %v1666 = vmul.f32 %v1597, %v1609
    %v1667 = vmul.f32 %v1598, %v1609
    %v1668 = vmul.f32 %v1599, %v1609
    %v1669 = vmul.f32 %v1600, %v1609
    %v1670 = vmul.f32 %v1601, %v1609
    %v1671 = vmul.f32 %v1602, %v1609
    %v1672 = vmul.f32 %v1603, %v1609
    %v1673 = vmul.f32 %v1604, %v1609
    %v1674 = vadd.f32 %v1477, %v1610
    %v1675 = vadd.f32 %v1478, %v1611
    %v1676 = vadd.f32 %v1479, %v1612
    %v1677 = vadd.f32 %v1480, %v1613
    %v1678 = vadd.f32 %v1481, %v1614
    %v1679 = vadd.f32 %v1482, %v1615
    %v1680 = vadd.f32 %v1483, %v1616
    %v1681 = vadd.f32 %v1484, %v1617
    %v1682 = vadd.f32 %v1485, %v1618
    %v1683 = vadd.f32 %v1486, %v1619
    %v1684 = vadd.f32 %v1487, %v1620
    %v1685 = vadd.f32 %v1488, %v1621
    %v1686 = vadd.f32 %v1489, %v1622
    %v1687 = vadd.f32 %v1490, %v1623
    %v1688 = vadd.f32 %v1491, %v1624
    %v1689 = vadd.f32 %v1492, %v1625
    %v1690 = vadd.f32 %v1493, %v1626
    %v1691 = vadd.f32 %v1494, %v1627
    %v1692 = vadd.f32 %v1495, %v1628
    %v1693 = vadd.f32 %v1496, %v1629
    %v1694 = vadd.f32 %v1497, %v1630
    %v1695 = vadd.f32 %v1498, %v1631
    %v1696 = vadd.f32 %v1499, %v1632
    %v1697 = vadd.f32 %v1500, %v1633
    %v1698 = vadd.f32 %v1501, %v1634
    %v1699 = vadd.f32 %v1502, %v1635
    %v1700 = vadd.f32 %v1503, %v1636
    %v1701 = vadd.f32 %v1504, %v1637
    %v1702 = vadd.f32 %v1505, %v1638
    %v1703 = vadd.f32 %v1506, %v1639
    %v1704 = vadd.f32 %v1507, %v1640
    %v1705 = vadd.f32 %v1508, %v1641
    %v1706 = vadd.f32 %v1509, %v1642
    %v1707 = vadd.f32 %v1510, %v1643
    %v1708 = vadd.f32 %v1511, %v1644
    %v1709 = vadd.f32 %v1512, %v1645
    %v1710 = vadd.f32 %v1513, %v1646
    %v1711 = vadd.f32 %v1514, %v1647
    %v1712 = vadd.f32 %v1515, %v1648
    %v1713 = vadd.f32 %v1516, %v1649
    %v1714 = vadd.f32 %v1517, %v1650
    %v1715 = vadd.f32 %v1518, %v1651
    %v1716 = vadd.f32 %v1519, %v1652
    %v1717 = vadd.f32 %v1520, %v1653
    %v1718 = vadd.f32 %v1521, %v1654
    %v1719 = vadd.f32 %v1522, %v1655
    %v1720 = vadd.f32 %v1523, %v1656
    %v1721 = vadd.f32 %v1524, %v1657
    %v1722 = vadd.f32 %v1525, %v1658
    %v1723 = vadd.f32 %v1526, %v1659
    %v1724 = vadd.f32 %v1527, %v1660
    %v1725 = vadd.f32 %v1528, %v1661
    %v1726 = vadd.f32 %v1529, %v1662
    %v1727 = vadd.f32 %v1530, %v1663
    %v1728 = vadd.f32 %v1531, %v1664
    %v1729 = vadd.f32 %v1532, %v1665
    %v1730 = vadd.f32 %v1533, %v1666
    %v1731 = vadd.f32 %v1534, %v1667
    %v1732 = vadd.f32 %v1535, %v1668
    %v1733 = vadd.f32 %v1536, %v1669
    %v1734 = vadd.f32 %v1537, %v1670
    %v1735 = vadd.f32 %v1538, %v1671
    %v1736 = vadd.f32 %v1539, %v1672
    %v1737 = vadd.f32 %v1540, %v1673
    %v1738 = vld [vmem:[%s2] sm:$0x1]
    %v1740 = vlaneseq
    %v1741 = vshrl.u32 %v1740, 7
    %v1742 = vsub.s32 0, %v1741
    %v1743 = vrot.slane %v1738, %v1742
    %v1745 = vmul.f32 %v1674, %v1743
    %v1746 = vmul.f32 %v1675, %v1743
    %v1747 = vmul.f32 %v1676, %v1743
    %v1748 = vmul.f32 %v1677, %v1743
    %v1749 = vmul.f32 %v1678, %v1743
    %v1750 = vmul.f32 %v1679, %v1743
    %v1751 = vmul.f32 %v1680, %v1743
    %v1752 = vmul.f32 %v1681, %v1743
    %v1753 = vmul.f32 %v1682, %v1743
    %v1754 = vmul.f32 %v1683, %v1743
    %v1755 = vmul.f32 %v1684, %v1743
    %v1756 = vmul.f32 %v1685, %v1743
    %v1757 = vmul.f32 %v1686, %v1743
    %v1758 = vmul.f32 %v1687, %v1743
    %v1759 = vmul.f32 %v1688, %v1743
    %v1760 = vmul.f32 %v1689, %v1743
    %v1761 = vmul.f32 %v1690, %v1743
    %v1762 = vmul.f32 %v1691, %v1743
    %v1763 = vmul.f32 %v1692, %v1743
    %v1764 = vmul.f32 %v1693, %v1743
    %v1765 = vmul.f32 %v1694, %v1743
    %v1766 = vmul.f32 %v1695, %v1743
    %v1767 = vmul.f32 %v1696, %v1743
    %v1768 = vmul.f32 %v1697, %v1743
    %v1769 = vmul.f32 %v1698, %v1743
    %v1770 = vmul.f32 %v1699, %v1743
    %v1771 = vmul.f32 %v1700, %v1743
    %v1772 = vmul.f32 %v1701, %v1743
    %v1773 = vmul.f32 %v1702, %v1743
    %v1774 = vmul.f32 %v1703, %v1743
    %v1775 = vmul.f32 %v1704, %v1743
    %v1776 = vmul.f32 %v1705, %v1743
    %v1777 = vmul.f32 %v1706, %v1743
    %v1778 = vmul.f32 %v1707, %v1743
    %v1779 = vmul.f32 %v1708, %v1743
    %v1780 = vmul.f32 %v1709, %v1743
    %v1781 = vmul.f32 %v1710, %v1743
    %v1782 = vmul.f32 %v1711, %v1743
    %v1783 = vmul.f32 %v1712, %v1743
    %v1784 = vmul.f32 %v1713, %v1743
    %v1785 = vmul.f32 %v1714, %v1743
    %v1786 = vmul.f32 %v1715, %v1743
    %v1787 = vmul.f32 %v1716, %v1743
    %v1788 = vmul.f32 %v1717, %v1743
    %v1789 = vmul.f32 %v1718, %v1743
    %v1790 = vmul.f32 %v1719, %v1743
    %v1791 = vmul.f32 %v1720, %v1743
    %v1792 = vmul.f32 %v1721, %v1743
    %v1793 = vmul.f32 %v1722, %v1743
    %v1794 = vmul.f32 %v1723, %v1743
    %v1795 = vmul.f32 %v1724, %v1743
    %v1796 = vmul.f32 %v1725, %v1743
    %v1797 = vmul.f32 %v1726, %v1743
    %v1798 = vmul.f32 %v1727, %v1743
    %v1799 = vmul.f32 %v1728, %v1743
    %v1800 = vmul.f32 %v1729, %v1743
    %v1801 = vmul.f32 %v1730, %v1743
    %v1802 = vmul.f32 %v1731, %v1743
    %v1803 = vmul.f32 %v1732, %v1743
    %v1804 = vmul.f32 %v1733, %v1743
    %v1805 = vmul.f32 %v1734, %v1743
    %v1806 = vmul.f32 %v1735, %v1743
    %v1807 = vmul.f32 %v1736, %v1743
    %v1808 = vmul.f32 %v1737, %v1743
    %v1809 = vld [vmem:[%s3] sm:$0x1]
    %v1811 = vlaneseq
    %v1812 = vshrl.u32 %v1811, 7
    %v1813 = vsub.s32 0, %v1812
    %v1814 = vrot.slane %v1809, %v1813
    %v1816 = vadd.f32 %v1745, %v1814
    %v1817 = vadd.f32 %v1746, %v1814
    %v1818 = vadd.f32 %v1747, %v1814
    %v1819 = vadd.f32 %v1748, %v1814
    %v1820 = vadd.f32 %v1749, %v1814
    %v1821 = vadd.f32 %v1750, %v1814
    %v1822 = vadd.f32 %v1751, %v1814
    %v1823 = vadd.f32 %v1752, %v1814
    %v1824 = vadd.f32 %v1753, %v1814
    %v1825 = vadd.f32 %v1754, %v1814
    %v1826 = vadd.f32 %v1755, %v1814
    %v1827 = vadd.f32 %v1756, %v1814
    %v1828 = vadd.f32 %v1757, %v1814
    %v1829 = vadd.f32 %v1758, %v1814
    %v1830 = vadd.f32 %v1759, %v1814
    %v1831 = vadd.f32 %v1760, %v1814
    %v1832 = vadd.f32 %v1761, %v1814
    %v1833 = vadd.f32 %v1762, %v1814
    %v1834 = vadd.f32 %v1763, %v1814
    %v1835 = vadd.f32 %v1764, %v1814
    %v1836 = vadd.f32 %v1765, %v1814
    %v1837 = vadd.f32 %v1766, %v1814
    %v1838 = vadd.f32 %v1767, %v1814
    %v1839 = vadd.f32 %v1768, %v1814
    %v1840 = vadd.f32 %v1769, %v1814
    %v1841 = vadd.f32 %v1770, %v1814
    %v1842 = vadd.f32 %v1771, %v1814
    %v1843 = vadd.f32 %v1772, %v1814
    %v1844 = vadd.f32 %v1773, %v1814
    %v1845 = vadd.f32 %v1774, %v1814
    %v1846 = vadd.f32 %v1775, %v1814
    %v1847 = vadd.f32 %v1776, %v1814
    %v1848 = vadd.f32 %v1777, %v1814
    %v1849 = vadd.f32 %v1778, %v1814
    %v1850 = vadd.f32 %v1779, %v1814
    %v1851 = vadd.f32 %v1780, %v1814
    %v1852 = vadd.f32 %v1781, %v1814
    %v1853 = vadd.f32 %v1782, %v1814
    %v1854 = vadd.f32 %v1783, %v1814
    %v1855 = vadd.f32 %v1784, %v1814
    %v1856 = vadd.f32 %v1785, %v1814
    %v1857 = vadd.f32 %v1786, %v1814
    %v1858 = vadd.f32 %v1787, %v1814
    %v1859 = vadd.f32 %v1788, %v1814
    %v1860 = vadd.f32 %v1789, %v1814
    %v1861 = vadd.f32 %v1790, %v1814
    %v1862 = vadd.f32 %v1791, %v1814
    %v1863 = vadd.f32 %v1792, %v1814
    %v1864 = vadd.f32 %v1793, %v1814
    %v1865 = vadd.f32 %v1794, %v1814
    %v1866 = vadd.f32 %v1795, %v1814
    %v1867 = vadd.f32 %v1796, %v1814
    %v1868 = vadd.f32 %v1797, %v1814
    %v1869 = vadd.f32 %v1798, %v1814
    %v1870 = vadd.f32 %v1799, %v1814
    %v1871 = vadd.f32 %v1800, %v1814
    %v1872 = vadd.f32 %v1801, %v1814
    %v1873 = vadd.f32 %v1802, %v1814
    %v1874 = vadd.f32 %v1803, %v1814
    %v1875 = vadd.f32 %v1804, %v1814
    %v1876 = vadd.f32 %v1805, %v1814
    %v1877 = vadd.f32 %v1806, %v1814
    %v1878 = vadd.f32 %v1807, %v1814
    %v1879 = vadd.f32 %v1808, %v1814
    %v1880 = vmax.f32 %v1816, 0.0
    %v1881 = vmax.f32 %v1817, 0.0
    %v1882 = vmax.f32 %v1818, 0.0
    %v1883 = vmax.f32 %v1819, 0.0
    %v1884 = vmax.f32 %v1820, 0.0
    %v1885 = vmax.f32 %v1821, 0.0
    %v1886 = vmax.f32 %v1822, 0.0
    %v1887 = vmax.f32 %v1823, 0.0
    %v1888 = vmax.f32 %v1824, 0.0
    %v1889 = vmax.f32 %v1825, 0.0
    %v1890 = vmax.f32 %v1826, 0.0
    %v1891 = vmax.f32 %v1827, 0.0
    %v1892 = vmax.f32 %v1828, 0.0
    %v1893 = vmax.f32 %v1829, 0.0
    %v1894 = vmax.f32 %v1830, 0.0
    %v1895 = vmax.f32 %v1831, 0.0
    %v1896 = vmax.f32 %v1832, 0.0
    %v1897 = vmax.f32 %v1833, 0.0
    %v1898 = vmax.f32 %v1834, 0.0
    %v1899 = vmax.f32 %v1835, 0.0
    %v1900 = vmax.f32 %v1836, 0.0
    %v1901 = vmax.f32 %v1837, 0.0
    %v1902 = vmax.f32 %v1838, 0.0
    %v1903 = vmax.f32 %v1839, 0.0
    %v1904 = vmax.f32 %v1840, 0.0
    %v1905 = vmax.f32 %v1841, 0.0
    %v1906 = vmax.f32 %v1842, 0.0
    %v1907 = vmax.f32 %v1843, 0.0
    %v1908 = vmax.f32 %v1844, 0.0
    %v1909 = vmax.f32 %v1845, 0.0
    %v1910 = vmax.f32 %v1846, 0.0
    %v1911 = vmax.f32 %v1847, 0.0
    %v1912 = vmax.f32 %v1848, 0.0
    %v1913 = vmax.f32 %v1849, 0.0
    %v1914 = vmax.f32 %v1850, 0.0
    %v1915 = vmax.f32 %v1851, 0.0
    %v1916 = vmax.f32 %v1852, 0.0
    %v1917 = vmax.f32 %v1853, 0.0
    %v1918 = vmax.f32 %v1854, 0.0
    %v1919 = vmax.f32 %v1855, 0.0
    %v1920 = vmax.f32 %v1856, 0.0
    %v1921 = vmax.f32 %v1857, 0.0
    %v1922 = vmax.f32 %v1858, 0.0
    %v1923 = vmax.f32 %v1859, 0.0
    %v1924 = vmax.f32 %v1860, 0.0
    %v1925 = vmax.f32 %v1861, 0.0
    %v1926 = vmax.f32 %v1862, 0.0
    %v1927 = vmax.f32 %v1863, 0.0
    %v1928 = vmax.f32 %v1864, 0.0
    %v1929 = vmax.f32 %v1865, 0.0
    %v1930 = vmax.f32 %v1866, 0.0
    %v1931 = vmax.f32 %v1867, 0.0
    %v1932 = vmax.f32 %v1868, 0.0
    %v1933 = vmax.f32 %v1869, 0.0
    %v1934 = vmax.f32 %v1870, 0.0
    %v1935 = vmax.f32 %v1871, 0.0
    %v1936 = vmax.f32 %v1872, 0.0
    %v1937 = vmax.f32 %v1873, 0.0
    %v1938 = vmax.f32 %v1874, 0.0
    %v1939 = vmax.f32 %v1875, 0.0
    %v1940 = vmax.f32 %v1876, 0.0
    %v1941 = vmax.f32 %v1877, 0.0
    %v1942 = vmax.f32 %v1878, 0.0
    %v1943 = vmax.f32 %v1879, 0.0
    %v1944 = vld [vmem:[%s4] sm:$0xff]
    %v1945 = vld [vmem:[%s4 + $0x8] sm:$0xff]
    %v1946 = vld [vmem:[%s4 + $0x10] sm:$0xff]
    %v1947 = vld [vmem:[%s4 + $0x18] sm:$0xff]
    %v1948 = vld [vmem:[%s4 + $0x20] sm:$0xff]
    %v1949 = vld [vmem:[%s4 + $0x28] sm:$0xff]
    %v1950 = vld [vmem:[%s4 + $0x30] sm:$0xff]
    %v1951 = vld [vmem:[%s4 + $0x38] sm:$0xff]
    %v1952 = vld [vmem:[%s4 + $0x40] sm:$0xff]
    %v1953 = vld [vmem:[%s4 + $0x48] sm:$0xff]
    %v1954 = vld [vmem:[%s4 + $0x50] sm:$0xff]
    %v1955 = vld [vmem:[%s4 + $0x58] sm:$0xff]
    %v1956 = vld [vmem:[%s4 + $0x60] sm:$0xff]
    %v1957 = vld [vmem:[%s4 + $0x68] sm:$0xff]
    %v1958 = vld [vmem:[%s4 + $0x70] sm:$0xff]
    %v1959 = vld [vmem:[%s4 + $0x78] sm:$0xff]
    %1960 = vmatprep.subr.mxu0 0.0
    %1961 = vmatpush1.msra.mxu0 %v1944
    %1962 = vmatprep.subr.mxu0 0.0
    %1963 = vmatpush1.msra.mxu0 %v1945
    %1964 = vmatprep.subr.mxu0 0.0
    %1965 = vmatpush1.msra.mxu0 %v1946
    %1966 = vmatprep.subr.mxu0 0.0
    %1967 = vmatpush1.msra.mxu0 %v1947
    %1968 = vmatprep.subr.mxu0 0.0
    %1969 = vmatpush1.msra.mxu0 %v1948
    %1970 = vmatprep.subr.mxu0 0.0
    %1971 = vmatpush1.msra.mxu0 %v1949
    %1972 = vmatprep.subr.mxu0 0.0
    %1973 = vmatpush1.msra.mxu0 %v1950
    %1974 = vmatprep.subr.mxu0 0.0
    %1975 = vmatpush1.msra.mxu0 %v1951
    %1976 = vmatprep.subr.mxu0 0.0
    %1977 = vmatpush1.msra.mxu0 %v1952
    %1978 = vmatprep.subr.mxu0 0.0
    %1979 = vmatpush1.msra.mxu0 %v1953
    %1980 = vmatprep.subr.mxu0 0.0
    %1981 = vmatpush1.msra.mxu0 %v1954
    %1982 = vmatprep.subr.mxu0 0.0
    %1983 = vmatpush1.msra.mxu0 %v1955
    %1984 = vmatprep.subr.mxu0 0.0
    %1985 = vmatpush1.msra.mxu0 %v1956
    %1986 = vmatprep.subr.mxu0 0.0
    %1987 = vmatpush1.msra.mxu0 %v1957
    %1988 = vmatprep.subr.mxu0 0.0
    %1989 = vmatpush1.msra.mxu0 %v1958
    %1990 = vmatprep.subr.mxu0 0.0
    %1991 = vmatpush1.msra.mxu0 %v1959
    %1992 = vmatprep.subr.mxu0 0.0
    %1993 = vmatpush1.msra.mxu0 0.0
    %1994 = vmatprep.subr.mxu0 0.0
    %1995 = vmatpush1.msra.mxu0 0.0
    %1996 = vmatprep.subr.mxu0 0.0
    %1997 = vmatpush1.msra.mxu0 0.0
    %1998 = vmatprep.subr.mxu0 0.0
    %1999 = vmatpush1.msra.mxu0 0.0
    %2000 = vmatprep.subr.mxu0 0.0
    %2001 = vmatpush1.msra.mxu0 0.0
    %2002 = vmatprep.subr.mxu0 0.0
    %2003 = vmatpush1.msra.mxu0 0.0
    %2004 = vmatprep.subr.mxu0 0.0
    %2005 = vmatpush1.msra.mxu0 0.0
    %2006 = vmatprep.subr.mxu0 0.0
    %2007 = vmatpush1.msra.mxu0 0.0
    %2008 = vmatprep.subr.mxu0 0.0
    %2009 = vmatpush1.msra.mxu0 0.0
    %2010 = vmatprep.subr.mxu0 0.0
    %2011 = vmatpush1.msra.mxu0 0.0
    %2012 = vmatprep.subr.mxu0 0.0
    %2013 = vmatpush1.msra.mxu0 0.0
    %2014 = vmatprep.subr.mxu0 0.0
    %2015 = vmatpush1.msra.mxu0 0.0
    %2016 = vmatprep.subr.mxu0 0.0
    %2017 = vmatpush1.msra.mxu0 0.0
    %2018 = vmatprep.subr.mxu0 0.0
    %2019 = vmatpush1.msra.mxu0 0.0
    %2020 = vmatprep.subr.mxu0 0.0
    %2021 = vmatpush1.msra.mxu0 0.0
    %2022 = vmatprep.subr.mxu0 0.0
    %2023 = vmatpush1.msra.mxu0 0.0
    %2024 = vmatprep.mubr.f32.mxu0 0.0
    %2025 = vmatmul.mubr.f32.gmra.mrb[0].mxu0 %v1880
    %v2026 = vpop.f32.mrb[0].mxu0
    %v2027 = vadd.f32 0.0, %v2026
    %v2028 = vpop.f32.mrb[0].mxu0
    %2029 = vmatprep.mubr.f32.mxu0 0.0
    %2030 = vmatmul.mubr.f32.gmra.mrb[0].mxu0 %v1881
    %v2031 = vpop.f32.mrb[0].mxu0
    %v2032 = vadd.f32 0.0, %v2031
    %v2033 = vpop.f32.mrb[0].mxu0
    %2034 = vmatprep.mubr.f32.mxu0 0.0
    %2035 = vmatmul.mubr.f32.gmra.mrb[0].mxu0 %v1882
    %v2036 = vpop.f32.mrb[0].mxu0
    %v2037 = vadd.f32 0.0, %v2036
    %v2038 = vpop.f32.mrb[0].mxu0
    %2039 = vmatprep.mubr.f32.mxu0 0.0
    %2040 = vmatmul.mubr.f32.gmra.mrb[0].mxu0 %v1883
    %v2041 = vpop.f32.mrb[0].mxu0
    %v2042 = vadd.f32 0.0, %v2041
    %v2043 = vpop.f32.mrb[0].mxu0
    %2044 = vmatprep.mubr.f32.mxu0 0.0
    %2045 = vmatmul.mubr.f32.gmra.mrb[0].mxu0 %v1884
    %v2046 = vpop.f32.mrb[0].mxu0
    %v2047 = vadd.f32 0.0, %v2046
    %v2048 = vpop.f32.mrb[0].mxu0
    %2049 = vmatprep.mubr.f32.mxu0 0.0
    %2050 = vmatmul.mubr.f32.gmra.mrb[0].mxu0 %v1885
    %v2051 = vpop.f32.mrb[0].mxu0
    %v2052 = vadd.f32 0.0, %v2051
    %v2053 = vpop.f32.mrb[0].mxu0
    %2054 = vmatprep.mubr.f32.mxu0 0.0
    %2055 = vmatmul.mubr.f32.gmra.mrb[0].mxu0 %v1886
    %v2056 = vpop.f32.mrb[0].mxu0
    %v2057 = vadd.f32 0.0, %v2056
    %v2058 = vpop.f32.mrb[0].mxu0
    %2059 = vmatprep.mubr.f32.mxu0 0.0
    %2060 = vmatmul.mubr.f32.gmra.mrb[0].mxu0 %v1887
    %v2061 = vpop.f32.mrb[0].mxu0
    %v2062 = vadd.f32 0.0, %v2061
    %v2063 = vpop.f32.mrb[0].mxu0
    %2064 = vmatprep.mubr.f32.mxu0 0.0
    %2065 = vmatmul.mubr.f32.gmra.mrb[0].mxu0 %v1888
    %v2066 = vpop.f32.mrb[0].mxu0
    %v2067 = vadd.f32 0.0, %v2066
    %v2068 = vpop.f32.mrb[0].mxu0
    %2069 = vmatprep.mubr.f32.mxu0 0.0
    %2070 = vmatmul.mubr.f32.gmra.mrb[0].mxu0 %v1889
    %v2071 = vpop.f32.mrb[0].mxu0
    %v2072 = vadd.f32 0.0, %v2071
    %v2073 = vpop.f32.mrb[0].mxu0
    %2074 = vmatprep.mubr.f32.mxu0 0.0
    %2075 = vmatmul.mubr.f32.gmra.mrb[0].mxu0 %v1890
    %v2076 = vpop.f32.mrb[0].mxu0
    %v2077 = vadd.f32 0.0, %v2076
    %v2078 = vpop.f32.mrb[0].mxu0
    %2079 = vmatprep.mubr.f32.mxu0 0.0
    %2080 = vmatmul.mubr.f32.gmra.mrb[0].mxu0 %v1891
    %v2081 = vpop.f32.mrb[0].mxu0
    %v2082 = vadd.f32 0.0, %v2081
    %v2083 = vpop.f32.mrb[0].mxu0
    %2084 = vmatprep.mubr.f32.mxu0 0.0
    %2085 = vmatmul.mubr.f32.gmra.mrb[0].mxu0 %v1892
    %v2086 = vpop.f32.mrb[0].mxu0
    %v2087 = vadd.f32 0.0, %v2086
    %v2088 = vpop.f32.mrb[0].mxu0
    %2089 = vmatprep.mubr.f32.mxu0 0.0
    %2090 = vmatmul.mubr.f32.gmra.mrb[0].mxu0 %v1893
    %v2091 = vpop.f32.mrb[0].mxu0
    %v2092 = vadd.f32 0.0, %v2091
    %v2093 = vpop.f32.mrb[0].mxu0
    %2094 = vmatprep.mubr.f32.mxu0 0.0
    %2095 = vmatmul.mubr.f32.gmra.mrb[0].mxu0 %v1894
    %v2096 = vpop.f32.mrb[0].mxu0
    %v2097 = vadd.f32 0.0, %v2096
    %v2098 = vpop.f32.mrb[0].mxu0
    %2099 = vmatprep.mubr.f32.mxu0 0.0
    %2100 = vmatmul.mubr.f32.gmra.mrb[0].mxu0 %v1895
    %v2101 = vpop.f32.mrb[0].mxu0
    %v2102 = vadd.f32 0.0, %v2101
    %v2103 = vpop.f32.mrb[0].mxu0
    %2104 = vmatprep.mubr.f32.mxu0 0.0
    %2105 = vmatmul.mubr.f32.gmra.mrb[0].mxu0 %v1896
    %v2106 = vpop.f32.mrb[0].mxu0
    %v2107 = vadd.f32 0.0, %v2106
    %v2108 = vpop.f32.mrb[0].mxu0
    %2109 = vmatprep.mubr.f32.mxu0 0.0
    %2110 = vmatmul.mubr.f32.gmra.mrb[0].mxu0 %v1897
    %v2111 = vpop.f32.mrb[0].mxu0
    %v2112 = vadd.f32 0.0, %v2111
    %v2113 = vpop.f32.mrb[0].mxu0
    %2114 = vmatprep.mubr.f32.mxu0 0.0
    %2115 = vmatmul.mubr.f32.gmra.mrb[0].mxu0 %v1898
    %v2116 = vpop.f32.mrb[0].mxu0
    %v2117 = vadd.f32 0.0, %v2116
    %v2118 = vpop.f32.mrb[0].mxu0
    %2119 = vmatprep.mubr.f32.mxu0 0.0
    %2120 = vmatmul.mubr.f32.gmra.mrb[0].mxu0 %v1899
    %v2121 = vpop.f32.mrb[0].mxu0
    %v2122 = vadd.f32 0.0, %v2121
    %v2123 = vpop.f32.mrb[0].mxu0
    %2124 = vmatprep.mubr.f32.mxu0 0.0
    %2125 = vmatmul.mubr.f32.gmra.mrb[0].mxu0 %v1900
    %v2126 = vpop.f32.mrb[0].mxu0
    %v2127 = vadd.f32 0.0, %v2126
    %v2128 = vpop.f32.mrb[0].mxu0
    %2129 = vmatprep.mubr.f32.mxu0 0.0
    %2130 = vmatmul.mubr.f32.gmra.mrb[0].mxu0 %v1901
    %v2131 = vpop.f32.mrb[0].mxu0
    %v2132 = vadd.f32 0.0, %v2131
    %v2133 = vpop.f32.mrb[0].mxu0
    %2134 = vmatprep.mubr.f32.mxu0 0.0
    %2135 = vmatmul.mubr.f32.gmra.mrb[0].mxu0 %v1902
    %v2136 = vpop.f32.mrb[0].mxu0
    %v2137 = vadd.f32 0.0, %v2136
    %v2138 = vpop.f32.mrb[0].mxu0
    %2139 = vmatprep.mubr.f32.mxu0 0.0
    %2140 = vmatmul.mubr.f32.gmra.mrb[0].mxu0 %v1903
    %v2141 = vpop.f32.mrb[0].mxu0
    %v2142 = vadd.f32 0.0, %v2141
    %v2143 = vpop.f32.mrb[0].mxu0
    %2144 = vmatprep.mubr.f32.mxu0 0.0
    %2145 = vmatmul.mubr.f32.gmra.mrb[0].mxu0 %v1904
    %v2146 = vpop.f32.mrb[0].mxu0
    %v2147 = vadd.f32 0.0, %v2146
    %v2148 = vpop.f32.mrb[0].mxu0
    %2149 = vmatprep.mubr.f32.mxu0 0.0
    %2150 = vmatmul.mubr.f32.gmra.mrb[0].mxu0 %v1905
    %v2151 = vpop.f32.mrb[0].mxu0
    %v2152 = vadd.f32 0.0, %v2151
    %v2153 = vpop.f32.mrb[0].mxu0
    %2154 = vmatprep.mubr.f32.mxu0 0.0
    %2155 = vmatmul.mubr.f32.gmra.mrb[0].mxu0 %v1906
    %v2156 = vpop.f32.mrb[0].mxu0
    %v2157 = vadd.f32 0.0, %v2156
    %v2158 = vpop.f32.mrb[0].mxu0
    %2159 = vmatprep.mubr.f32.mxu0 0.0
    %2160 = vmatmul.mubr.f32.gmra.mrb[0].mxu0 %v1907
    %v2161 = vpop.f32.mrb[0].mxu0
    %v2162 = vadd.f32 0.0, %v2161
    %v2163 = vpop.f32.mrb[0].mxu0
    %2164 = vmatprep.mubr.f32.mxu0 0.0
    %2165 = vmatmul.mubr.f32.gmra.mrb[0].mxu0 %v1908
    %v2166 = vpop.f32.mrb[0].mxu0
    %v2167 = vadd.f32 0.0, %v2166
    %v2168 = vpop.f32.mrb[0].mxu0
    %2169 = vmatprep.mubr.f32.mxu0 0.0
    %2170 = vmatmul.mubr.f32.gmra.mrb[0].mxu0 %v1909
    %v2171 = vpop.f32.mrb[0].mxu0
    %v2172 = vadd.f32 0.0, %v2171
    %v2173 = vpop.f32.mrb[0].mxu0
    %2174 = vmatprep.mubr.f32.mxu0 0.0
    %2175 = vmatmul.mubr.f32.gmra.mrb[0].mxu0 %v1910
    %v2176 = vpop.f32.mrb[0].mxu0
    %v2177 = vadd.f32 0.0, %v2176
    %v2178 = vpop.f32.mrb[0].mxu0
    %2179 = vmatprep.mubr.f32.mxu0 0.0
    %2180 = vmatmul.mubr.f32.gmra.mrb[0].mxu0 %v1911
    %v2181 = vpop.f32.mrb[0].mxu0
    %v2182 = vadd.f32 0.0, %v2181
    %v2183 = vpop.f32.mrb[0].mxu0
    %2184 = vmatprep.mubr.f32.mxu0 0.0
    %2185 = vmatmul.mubr.f32.gmra.mrb[0].mxu0 %v1912
    %v2186 = vpop.f32.mrb[0].mxu0
    %v2187 = vadd.f32 0.0, %v2186
    %v2188 = vpop.f32.mrb[0].mxu0
    %2189 = vmatprep.mubr.f32.mxu0 0.0
    %2190 = vmatmul.mubr.f32.gmra.mrb[0].mxu0 %v1913
    %v2191 = vpop.f32.mrb[0].mxu0
    %v2192 = vadd.f32 0.0, %v2191
    %v2193 = vpop.f32.mrb[0].mxu0
    %2194 = vmatprep.mubr.f32.mxu0 0.0
    %2195 = vmatmul.mubr.f32.gmra.mrb[0].mxu0 %v1914
    %v2196 = vpop.f32.mrb[0].mxu0
    %v2197 = vadd.f32 0.0, %v2196
    %v2198 = vpop.f32.mrb[0].mxu0
    %2199 = vmatprep.mubr.f32.mxu0 0.0
    %2200 = vmatmul.mubr.f32.gmra.mrb[0].mxu0 %v1915
    %v2201 = vpop.f32.mrb[0].mxu0
    %v2202 = vadd.f32 0.0, %v2201
    %v2203 = vpop.f32.mrb[0].mxu0
    %2204 = vmatprep.mubr.f32.mxu0 0.0
    %2205 = vmatmul.mubr.f32.gmra.mrb[0].mxu0 %v1916
    %v2206 = vpop.f32.mrb[0].mxu0
    %v2207 = vadd.f32 0.0, %v2206
    %v2208 = vpop.f32.mrb[0].mxu0
    %2209 = vmatprep.mubr.f32.mxu0 0.0
    %2210 = vmatmul.mubr.f32.gmra.mrb[0].mxu0 %v1917
    %v2211 = vpop.f32.mrb[0].mxu0
    %v2212 = vadd.f32 0.0, %v2211
    %v2213 = vpop.f32.mrb[0].mxu0
    %2214 = vmatprep.mubr.f32.mxu0 0.0
    %2215 = vmatmul.mubr.f32.gmra.mrb[0].mxu0 %v1918
    %v2216 = vpop.f32.mrb[0].mxu0
    %v2217 = vadd.f32 0.0, %v2216
    %v2218 = vpop.f32.mrb[0].mxu0
    %2219 = vmatprep.mubr.f32.mxu0 0.0
    %2220 = vmatmul.mubr.f32.gmra.mrb[0].mxu0 %v1919
    %v2221 = vpop.f32.mrb[0].mxu0
    %v2222 = vadd.f32 0.0, %v2221
    %v2223 = vpop.f32.mrb[0].mxu0
    %2224 = vmatprep.mubr.f32.mxu0 0.0
    %2225 = vmatmul.mubr.f32.gmra.mrb[0].mxu0 %v1920
    %v2226 = vpop.f32.mrb[0].mxu0
    %v2227 = vadd.f32 0.0, %v2226
    %v2228 = vpop.f32.mrb[0].mxu0
    %2229 = vmatprep.mubr.f32.mxu0 0.0
    %2230 = vmatmul.mubr.f32.gmra.mrb[0].mxu0 %v1921
    %v2231 = vpop.f32.mrb[0].mxu0
    %v2232 = vadd.f32 0.0, %v2231
    %v2233 = vpop.f32.mrb[0].mxu0
    %2234 = vmatprep.mubr.f32.mxu0 0.0
    %2235 = vmatmul.mubr.f32.gmra.mrb[0].mxu0 %v1922
    %v2236 = vpop.f32.mrb[0].mxu0
    %v2237 = vadd.f32 0.0, %v2236
    %v2238 = vpop.f32.mrb[0].mxu0
    %2239 = vmatprep.mubr.f32.mxu0 0.0
    %2240 = vmatmul.mubr.f32.gmra.mrb[0].mxu0 %v1923
    %v2241 = vpop.f32.mrb[0].mxu0
    %v2242 = vadd.f32 0.0, %v2241
    %v2243 = vpop.f32.mrb[0].mxu0
    %2244 = vmatprep.mubr.f32.mxu0 0.0
    %2245 = vmatmul.mubr.f32.gmra.mrb[0].mxu0 %v1924
    %v2246 = vpop.f32.mrb[0].mxu0
    %v2247 = vadd.f32 0.0, %v2246
    %v2248 = vpop.f32.mrb[0].mxu0
    %2249 = vmatprep.mubr.f32.mxu0 0.0
    %2250 = vmatmul.mubr.f32.gmra.mrb[0].mxu0 %v1925
    %v2251 = vpop.f32.mrb[0].mxu0
    %v2252 = vadd.f32 0.0, %v2251
    %v2253 = vpop.f32.mrb[0].mxu0
    %2254 = vmatprep.mubr.f32.mxu0 0.0
    %2255 = vmatmul.mubr.f32.gmra.mrb[0].mxu0 %v1926
    %v2256 = vpop.f32.mrb[0].mxu0
    %v2257 = vadd.f32 0.0, %v2256
    %v2258 = vpop.f32.mrb[0].mxu0
    %2259 = vmatprep.mubr.f32.mxu0 0.0
    %2260 = vmatmul.mubr.f32.gmra.mrb[0].mxu0 %v1927
    %v2261 = vpop.f32.mrb[0].mxu0
    %v2262 = vadd.f32 0.0, %v2261
    %v2263 = vpop.f32.mrb[0].mxu0
    %2264 = vmatprep.mubr.f32.mxu0 0.0
    %2265 = vmatmul.mubr.f32.gmra.mrb[0].mxu0 %v1928
    %v2266 = vpop.f32.mrb[0].mxu0
    %v2267 = vadd.f32 0.0, %v2266
    %v2268 = vpop.f32.mrb[0].mxu0
    %2269 = vmatprep.mubr.f32.mxu0 0.0
    %2270 = vmatmul.mubr.f32.gmra.mrb[0].mxu0 %v1929
    %v2271 = vpop.f32.mrb[0].mxu0
    %v2272 = vadd.f32 0.0, %v2271
    %v2273 = vpop.f32.mrb[0].mxu0
    %2274 = vmatprep.mubr.f32.mxu0 0.0
    %2275 = vmatmul.mubr.f32.gmra.mrb[0].mxu0 %v1930
    %v2276 = vpop.f32.mrb[0].mxu0
    %v2277 = vadd.f32 0.0, %v2276
    %v2278 = vpop.f32.mrb[0].mxu0
    %2279 = vmatprep.mubr.f32.mxu0 0.0
    %2280 = vmatmul.mubr.f32.gmra.mrb[0].mxu0 %v1931
    %v2281 = vpop.f32.mrb[0].mxu0
    %v2282 = vadd.f32 0.0, %v2281
    %v2283 = vpop.f32.mrb[0].mxu0
    %2284 = vmatprep.mubr.f32.mxu0 0.0
    %2285 = vmatmul.mubr.f32.gmra.mrb[0].mxu0 %v1932
    %v2286 = vpop.f32.mrb[0].mxu0
    %v2287 = vadd.f32 0.0, %v2286
    %v2288 = vpop.f32.mrb[0].mxu0
    %2289 = vmatprep.mubr.f32.mxu0 0.0
    %2290 = vmatmul.mubr.f32.gmra.mrb[0].mxu0 %v1933
    %v2291 = vpop.f32.mrb[0].mxu0
    %v2292 = vadd.f32 0.0, %v2291
    %v2293 = vpop.f32.mrb[0].mxu0
    %2294 = vmatprep.mubr.f32.mxu0 0.0
    %2295 = vmatmul.mubr.f32.gmra.mrb[0].mxu0 %v1934
    %v2296 = vpop.f32.mrb[0].mxu0
    %v2297 = vadd.f32 0.0, %v2296
    %v2298 = vpop.f32.mrb[0].mxu0
    %2299 = vmatprep.mubr.f32.mxu0 0.0
    %2300 = vmatmul.mubr.f32.gmra.mrb[0].mxu0 %v1935
    %v2301 = vpop.f32.mrb[0].mxu0
    %v2302 = vadd.f32 0.0, %v2301
    %v2303 = vpop.f32.mrb[0].mxu0
    %2304 = vmatprep.mubr.f32.mxu0 0.0
    %2305 = vmatmul.mubr.f32.gmra.mrb[0].mxu0 %v1936
    %v2306 = vpop.f32.mrb[0].mxu0
    %v2307 = vadd.f32 0.0, %v2306
    %v2308 = vpop.f32.mrb[0].mxu0
    %2309 = vmatprep.mubr.f32.mxu0 0.0
    %2310 = vmatmul.mubr.f32.gmra.mrb[0].mxu0 %v1937
    %v2311 = vpop.f32.mrb[0].mxu0
    %v2312 = vadd.f32 0.0, %v2311
    %v2313 = vpop.f32.mrb[0].mxu0
    %2314 = vmatprep.mubr.f32.mxu0 0.0
    %2315 = vmatmul.mubr.f32.gmra.mrb[0].mxu0 %v1938
    %v2316 = vpop.f32.mrb[0].mxu0
    %v2317 = vadd.f32 0.0, %v2316
    %v2318 = vpop.f32.mrb[0].mxu0
    %2319 = vmatprep.mubr.f32.mxu0 0.0
    %2320 = vmatmul.mubr.f32.gmra.mrb[0].mxu0 %v1939
    %v2321 = vpop.f32.mrb[0].mxu0
    %v2322 = vadd.f32 0.0, %v2321
    %v2323 = vpop.f32.mrb[0].mxu0
    %2324 = vmatprep.mubr.f32.mxu0 0.0
    %2325 = vmatmul.mubr.f32.gmra.mrb[0].mxu0 %v1940
    %v2326 = vpop.f32.mrb[0].mxu0
    %v2327 = vadd.f32 0.0, %v2326
    %v2328 = vpop.f32.mrb[0].mxu0
    %2329 = vmatprep.mubr.f32.mxu0 0.0
    %2330 = vmatmul.mubr.f32.gmra.mrb[0].mxu0 %v1941
    %v2331 = vpop.f32.mrb[0].mxu0
    %v2332 = vadd.f32 0.0, %v2331
    %v2333 = vpop.f32.mrb[0].mxu0
    %2334 = vmatprep.mubr.f32.mxu0 0.0
    %2335 = vmatmul.mubr.f32.gmra.mrb[0].mxu0 %v1942
    %v2336 = vpop.f32.mrb[0].mxu0
    %v2337 = vadd.f32 0.0, %v2336
    %v2338 = vpop.f32.mrb[0].mxu0
    %2339 = vmatprep.mubr.f32.mxu0 0.0
    %2340 = vmatmul.mubr.f32.gmra.mrb[0].mxu0 %v1943
    %v2341 = vpop.f32.mrb[0].mxu0
    %v2342 = vadd.f32 0.0, %v2341
    %v2343 = vpop.f32.mrb[0].mxu0
    %2344 = vdwg.mxu0
    %v2345 = vld [vmem:[%s5] sm:$0x1]
    %v2347 = vlaneseq
    %v2348 = vshrl.u32 %v2347, 7
    %v2349 = vsub.s32 0, %v2348
    %v2350 = vrot.slane %v2345, %v2349
    %v2352 = vmul.f32 %v2027, %v2350
    %v2353 = vmul.f32 %v2032, %v2350
    %v2354 = vmul.f32 %v2037, %v2350
    %v2355 = vmul.f32 %v2042, %v2350
    %v2356 = vmul.f32 %v2047, %v2350
    %v2357 = vmul.f32 %v2052, %v2350
    %v2358 = vmul.f32 %v2057, %v2350
    %v2359 = vmul.f32 %v2062, %v2350
    %v2360 = vmul.f32 %v2067, %v2350
    %v2361 = vmul.f32 %v2072, %v2350
    %v2362 = vmul.f32 %v2077, %v2350
    %v2363 = vmul.f32 %v2082, %v2350
    %v2364 = vmul.f32 %v2087, %v2350
    %v2365 = vmul.f32 %v2092, %v2350
    %v2366 = vmul.f32 %v2097, %v2350
    %v2367 = vmul.f32 %v2102, %v2350
    %v2368 = vmul.f32 %v2107, %v2350
    %v2369 = vmul.f32 %v2112, %v2350
    %v2370 = vmul.f32 %v2117, %v2350
    %v2371 = vmul.f32 %v2122, %v2350
    %v2372 = vmul.f32 %v2127, %v2350
    %v2373 = vmul.f32 %v2132, %v2350
    %v2374 = vmul.f32 %v2137, %v2350
    %v2375 = vmul.f32 %v2142, %v2350
    %v2376 = vmul.f32 %v2147, %v2350
    %v2377 = vmul.f32 %v2152, %v2350
    %v2378 = vmul.f32 %v2157, %v2350
    %v2379 = vmul.f32 %v2162, %v2350
    %v2380 = vmul.f32 %v2167, %v2350
    %v2381 = vmul.f32 %v2172, %v2350
    %v2382 = vmul.f32 %v2177, %v2350
    %v2383 = vmul.f32 %v2182, %v2350
    %v2384 = vmul.f32 %v2187, %v2350
    %v2385 = vmul.f32 %v2192, %v2350
    %v2386 = vmul.f32 %v2197, %v2350
    %v2387 = vmul.f32 %v2202, %v2350
    %v2388 = vmul.f32 %v2207, %v2350
    %v2389 = vmul.f32 %v2212, %v2350
    %v2390 = vmul.f32 %v2217, %v2350
    %v2391 = vmul.f32 %v2222, %v2350
    %v2392 = vmul.f32 %v2227, %v2350
    %v2393 = vmul.f32 %v2232, %v2350
    %v2394 = vmul.f32 %v2237, %v2350
    %v2395 = vmul.f32 %v2242, %v2350
    %v2396 = vmul.f32 %v2247, %v2350
    %v2397 = vmul.f32 %v2252, %v2350
    %v2398 = vmul.f32 %v2257, %v2350
    %v2399 = vmul.f32 %v2262, %v2350
    %v2400 = vmul.f32 %v2267, %v2350
    %v2401 = vmul.f32 %v2272, %v2350
    %v2402 = vmul.f32 %v2277, %v2350
    %v2403 = vmul.f32 %v2282, %v2350
    %v2404 = vmul.f32 %v2287, %v2350
    %v2405 = vmul.f32 %v2292, %v2350
    %v2406 = vmul.f32 %v2297, %v2350
    %v2407 = vmul.f32 %v2302, %v2350
    %v2408 = vmul.f32 %v2307, %v2350
    %v2409 = vmul.f32 %v2312, %v2350
    %v2410 = vmul.f32 %v2317, %v2350
    %v2411 = vmul.f32 %v2322, %v2350
    %v2412 = vmul.f32 %v2327, %v2350
    %v2413 = vmul.f32 %v2332, %v2350
    %v2414 = vmul.f32 %v2337, %v2350
    %v2415 = vmul.f32 %v2342, %v2350
    %v2416 = vld [vmem:[%s6] sm:$0x1]
    %v2418 = vlaneseq
    %v2419 = vshrl.u32 %v2418, 7
    %v2420 = vsub.s32 0, %v2419
    %v2421 = vrot.slane %v2416, %v2420
    %v2423 = vadd.f32 %v2352, %v2421
    %v2424 = vadd.f32 %v2353, %v2421
    %v2425 = vadd.f32 %v2354, %v2421
    %v2426 = vadd.f32 %v2355, %v2421
    %v2427 = vadd.f32 %v2356, %v2421
    %v2428 = vadd.f32 %v2357, %v2421
    %v2429 = vadd.f32 %v2358, %v2421
    %v2430 = vadd.f32 %v2359, %v2421
    %v2431 = vadd.f32 %v2360, %v2421
    %v2432 = vadd.f32 %v2361, %v2421
    %v2433 = vadd.f32 %v2362, %v2421
    %v2434 = vadd.f32 %v2363, %v2421
    %v2435 = vadd.f32 %v2364, %v2421
    %v2436 = vadd.f32 %v2365, %v2421
    %v2437 = vadd.f32 %v2366, %v2421
    %v2438 = vadd.f32 %v2367, %v2421
    %v2439 = vadd.f32 %v2368, %v2421
    %v2440 = vadd.f32 %v2369, %v2421
    %v2441 = vadd.f32 %v2370, %v2421
    %v2442 = vadd.f32 %v2371, %v2421
    %v2443 = vadd.f32 %v2372, %v2421
    %v2444 = vadd.f32 %v2373, %v2421
    %v2445 = vadd.f32 %v2374, %v2421
    %v2446 = vadd.f32 %v2375, %v2421
    %v2447 = vadd.f32 %v2376, %v2421
    %v2448 = vadd.f32 %v2377, %v2421
    %v2449 = vadd.f32 %v2378, %v2421
    %v2450 = vadd.f32 %v2379, %v2421
    %v2451 = vadd.f32 %v2380, %v2421
    %v2452 = vadd.f32 %v2381, %v2421
    %v2453 = vadd.f32 %v2382, %v2421
    %v2454 = vadd.f32 %v2383, %v2421
    %v2455 = vadd.f32 %v2384, %v2421
    %v2456 = vadd.f32 %v2385, %v2421
    %v2457 = vadd.f32 %v2386, %v2421
    %v2458 = vadd.f32 %v2387, %v2421
    %v2459 = vadd.f32 %v2388, %v2421
    %v2460 = vadd.f32 %v2389, %v2421
    %v2461 = vadd.f32 %v2390, %v2421
    %v2462 = vadd.f32 %v2391, %v2421
    %v2463 = vadd.f32 %v2392, %v2421
    %v2464 = vadd.f32 %v2393, %v2421
    %v2465 = vadd.f32 %v2394, %v2421
    %v2466 = vadd.f32 %v2395, %v2421
    %v2467 = vadd.f32 %v2396, %v2421
    %v2468 = vadd.f32 %v2397, %v2421
    %v2469 = vadd.f32 %v2398, %v2421
    %v2470 = vadd.f32 %v2399, %v2421
    %v2471 = vadd.f32 %v2400, %v2421
    %v2472 = vadd.f32 %v2401, %v2421
    %v2473 = vadd.f32 %v2402, %v2421
    %v2474 = vadd.f32 %v2403, %v2421
    %v2475 = vadd.f32 %v2404, %v2421
    %v2476 = vadd.f32 %v2405, %v2421
    %v2477 = vadd.f32 %v2406, %v2421
    %v2478 = vadd.f32 %v2407, %v2421
    %v2479 = vadd.f32 %v2408, %v2421
    %v2480 = vadd.f32 %v2409, %v2421
    %v2481 = vadd.f32 %v2410, %v2421
    %v2482 = vadd.f32 %v2411, %v2421
    %v2483 = vadd.f32 %v2412, %v2421
    %v2484 = vadd.f32 %v2413, %v2421
    %v2485 = vadd.f32 %v2414, %v2421
    %v2486 = vadd.f32 %v2415, %v2421
    %v2487 = vmax.f32 %v2423, 0.0
    %v2488 = vmax.f32 %v2424, 0.0
    %v2489 = vmax.f32 %v2425, 0.0
    %v2490 = vmax.f32 %v2426, 0.0
    %v2491 = vmax.f32 %v2427, 0.0
    %v2492 = vmax.f32 %v2428, 0.0
    %v2493 = vmax.f32 %v2429, 0.0
    %v2494 = vmax.f32 %v2430, 0.0
    %v2495 = vmax.f32 %v2431, 0.0
    %v2496 = vmax.f32 %v2432, 0.0
    %v2497 = vmax.f32 %v2433, 0.0
    %v2498 = vmax.f32 %v2434, 0.0
    %v2499 = vmax.f32 %v2435, 0.0
    %v2500 = vmax.f32 %v2436, 0.0
    %v2501 = vmax.f32 %v2437, 0.0
    %v2502 = vmax.f32 %v2438, 0.0
    %v2503 = vmax.f32 %v2439, 0.0
    %v2504 = vmax.f32 %v2440, 0.0
    %v2505 = vmax.f32 %v2441, 0.0
    %v2506 = vmax.f32 %v2442, 0.0
    %v2507 = vmax.f32 %v2443, 0.0
    %v2508 = vmax.f32 %v2444, 0.0
    %v2509 = vmax.f32 %v2445, 0.0
    %v2510 = vmax.f32 %v2446, 0.0
    %v2511 = vmax.f32 %v2447, 0.0
    %v2512 = vmax.f32 %v2448, 0.0
    %v2513 = vmax.f32 %v2449, 0.0
    %v2514 = vmax.f32 %v2450, 0.0
    %v2515 = vmax.f32 %v2451, 0.0
    %v2516 = vmax.f32 %v2452, 0.0
    %v2517 = vmax.f32 %v2453, 0.0
    %v2518 = vmax.f32 %v2454, 0.0
    %v2519 = vmax.f32 %v2455, 0.0
    %v2520 = vmax.f32 %v2456, 0.0
    %v2521 = vmax.f32 %v2457, 0.0
    %v2522 = vmax.f32 %v2458, 0.0
    %v2523 = vmax.f32 %v2459, 0.0
    %v2524 = vmax.f32 %v2460, 0.0
    %v2525 = vmax.f32 %v2461, 0.0
    %v2526 = vmax.f32 %v2462, 0.0
    %v2527 = vmax.f32 %v2463, 0.0
    %v2528 = vmax.f32 %v2464, 0.0
    %v2529 = vmax.f32 %v2465, 0.0
    %v2530 = vmax.f32 %v2466, 0.0
    %v2531 = vmax.f32 %v2467, 0.0
    %v2532 = vmax.f32 %v2468, 0.0
    %v2533 = vmax.f32 %v2469, 0.0
    %v2534 = vmax.f32 %v2470, 0.0
    %v2535 = vmax.f32 %v2471, 0.0
    %v2536 = vmax.f32 %v2472, 0.0
    %v2537 = vmax.f32 %v2473, 0.0
    %v2538 = vmax.f32 %v2474, 0.0
    %v2539 = vmax.f32 %v2475, 0.0
    %v2540 = vmax.f32 %v2476, 0.0
    %v2541 = vmax.f32 %v2477, 0.0
    %v2542 = vmax.f32 %v2478, 0.0
    %v2543 = vmax.f32 %v2479, 0.0
    %v2544 = vmax.f32 %v2480, 0.0
    %v2545 = vmax.f32 %v2481, 0.0
    %v2546 = vmax.f32 %v2482, 0.0
    %v2547 = vmax.f32 %v2483, 0.0
    %v2548 = vmax.f32 %v2484, 0.0
    %v2549 = vmax.f32 %v2485, 0.0
    %v2550 = vmax.f32 %v2486, 0.0
    %2551 = vst [vmem:[#allocation2] sm:$0xff] %v2487
    %2552 = vst [vmem:[#allocation2 + $0x8] sm:$0xff] %v2488
    %2553 = vst [vmem:[#allocation2 + $0x10] sm:$0xff] %v2489
    %2554 = vst [vmem:[#allocation2 + $0x18] sm:$0xff] %v2490
    %2555 = vst [vmem:[#allocation2 + $0x20] sm:$0xff] %v2491
    %2556 = vst [vmem:[#allocation2 + $0x28] sm:$0xff] %v2492
    %2557 = vst [vmem:[#allocation2 + $0x30] sm:$0xff] %v2493
    %2558 = vst [vmem:[#allocation2 + $0x38] sm:$0xff] %v2494
    %2559 = vst [vmem:[#allocation2 + $0x40] sm:$0xff] %v2495
    %2560 = vst [vmem:[#allocation2 + $0x48] sm:$0xff] %v2496
    %2561 = vst [vmem:[#allocation2 + $0x50] sm:$0xff] %v2497
    %2562 = vst [vmem:[#allocation2 + $0x58] sm:$0xff] %v2498
    %2563 = vst [vmem:[#allocation2 + $0x60] sm:$0xff] %v2499
    %2564 = vst [vmem:[#allocation2 + $0x68] sm:$0xff] %v2500
    %2565 = vst [vmem:[#allocation2 + $0x70] sm:$0xff] %v2501
    %2566 = vst [vmem:[#allocation2 + $0x78] sm:$0xff] %v2502
    %2567 = vst [vmem:[#allocation2 + $0x80] sm:$0xff] %v2503
    %2568 = vst [vmem:[#allocation2 + $0x88] sm:$0xff] %v2504
    %2569 = vst [vmem:[#allocation2 + $0x90] sm:$0xff] %v2505
    %2570 = vst [vmem:[#allocation2 + $0x98] sm:$0xff] %v2506
    %2571 = vst [vmem:[#allocation2 + $0xa0] sm:$0xff] %v2507
    %2572 = vst [vmem:[#allocation2 + $0xa8] sm:$0xff] %v2508
    %2573 = vst [vmem:[#allocation2 + $0xb0] sm:$0xff] %v2509
    %2574 = vst [vmem:[#allocation2 + $0xb8] sm:$0xff] %v2510
    %2575 = vst [vmem:[#allocation2 + $0xc0] sm:$0xff] %v2511
    %2576 = vst [vmem:[#allocation2 + $0xc8] sm:$0xff] %v2512
    %2577 = vst [vmem:[#allocation2 + $0xd0] sm:$0xff] %v2513
    %2578 = vst [vmem:[#allocation2 + $0xd8] sm:$0xff] %v2514
    %2579 = vst [vmem:[#allocation2 + $0xe0] sm:$0xff] %v2515
    %2580 = vst [vmem:[#allocation2 + $0xe8] sm:$0xff] %v2516
    %2581 = vst [vmem:[#allocation2 + $0xf0] sm:$0xff] %v2517
    %2582 = vst [vmem:[#allocation2 + $0xf8] sm:$0xff] %v2518
    %2583 = vst [vmem:[#allocation2 + $0x100] sm:$0xff] %v2519
    %2584 = vst [vmem:[#allocation2 + $0x108] sm:$0xff] %v2520
    %2585 = vst [vmem:[#allocation2 + $0x110] sm:$0xff] %v2521
    %2586 = vst [vmem:[#allocation2 + $0x118] sm:$0xff] %v2522
    %2587 = vst [vmem:[#allocation2 + $0x120] sm:$0xff] %v2523
    %2588 = vst [vmem:[#allocation2 + $0x128] sm:$0xff] %v2524
    %2589 = vst [vmem:[#allocation2 + $0x130] sm:$0xff] %v2525
    %2590 = vst [vmem:[#allocation2 + $0x138] sm:$0xff] %v2526
    %2591 = vst [vmem:[#allocation2 + $0x140] sm:$0xff] %v2527
    %2592 = vst [vmem:[#allocation2 + $0x148] sm:$0xff] %v2528
    %2593 = vst [vmem:[#allocation2 + $0x150] sm:$0xff] %v2529
    %2594 = vst [vmem:[#allocation2 + $0x158] sm:$0xff] %v2530
    %2595 = vst [vmem:[#allocation2 + $0x160] sm:$0xff] %v2531
    %2596 = vst [vmem:[#allocation2 + $0x168] sm:$0xff] %v2532
    %2597 = vst [vmem:[#allocation2 + $0x170] sm:$0xff] %v2533
    %2598 = vst [vmem:[#allocation2 + $0x178] sm:$0xff] %v2534
    %2599 = vst [vmem:[#allocation2 + $0x180] sm:$0xff] %v2535
    %2600 = vst [vmem:[#allocation2 + $0x188] sm:$0xff] %v2536
    %2601 = vst [vmem:[#allocation2 + $0x190] sm:$0xff] %v2537
    %2602 = vst [vmem:[#allocation2 + $0x198] sm:$0xff] %v2538
    %2603 = vst [vmem:[#allocation2 + $0x1a0] sm:$0xff] %v2539
    %2604 = vst [vmem:[#allocation2 + $0x1a8] sm:$0xff] %v2540
    %2605 = vst [vmem:[#allocation2 + $0x1b0] sm:$0xff] %v2541
    %2606 = vst [vmem:[#allocation2 + $0x1b8] sm:$0xff] %v2542
    %2607 = vst [vmem:[#allocation2 + $0x1c0] sm:$0xff] %v2543
    %2608 = vst [vmem:[#allocation2 + $0x1c8] sm:$0xff] %v2544
    %2609 = vst [vmem:[#allocation2 + $0x1d0] sm:$0xff] %v2545
    %2610 = vst [vmem:[#allocation2 + $0x1d8] sm:$0xff] %v2546
    %2611 = vst [vmem:[#allocation2 + $0x1e0] sm:$0xff] %v2547
    %2612 = vst [vmem:[#allocation2 + $0x1e8] sm:$0xff] %v2548
    %2613 = vst [vmem:[#allocation2 + $0x1f0] sm:$0xff] %v2549
    %2614 = vst [vmem:[#allocation2 + $0x1f8] sm:$0xff] %v2550
    // Predicated region
    $region30: #{tpu_custom_call.1} parent=1 // pred_check
      _
    $region31: #{tpu_custom_call.1} parent=1 // pred_check_branch
      %2616 = sbr.rel (0) target = $region33
    $region32: #{tpu_custom_call.1} parent=1 // pred_region
      %s2618 = ssub.s32 8192, 8192
      %2619 = vsyncadd [#allocation3], %s2618
      %s2620 = sshll.u32 [#allocation2], 4
      %s2621 = int_to_ptr.vmem [resolvable:$true] %s2620
      %2626 = dma.vmem_to_hbm [thread:$0]  %s2621, 8192, %s7, [#allocation3], 128, 128, 8
    $region33: #{tpu_custom_call.1} parent=1 // pred_fallthru
      _
    // Predicated region
    $region34: #{tpu_custom_call.1} parent=1 // pred_check
      _
    $region35: #{tpu_custom_call.1} parent=1 // pred_check_branch
      %2628 = sbr.rel (0) target = $region37
    $region36: #{tpu_custom_call.1} parent=1 // pred_region
      %2629 = dma.done [#allocation3], 8192
    $region37: #{tpu_custom_call.1} parent=1 // pred_fallthru
      _
    %2630 = vsyncpa [#allocation3], 1

</llo_original>
